<compile_context>
chip_gen: v7x
topology: tpu7x:2x2x1
jax: 0.10.0
libtpu: 0.0.40
codegen_flags: <defaults>
</compile_context>

<pallas_src>
import functools

import jax
import jax.numpy as jnp
from jax.experimental import pallas as pl
from jax.experimental.pallas import tpu as pltpu


# ---------------------------------------------------------------------------
# Fused kernel: maxpool2x2 -> pad -> conv3x3+bias+ReLU -> pad -> conv3x3+bias+ReLU
# ---------------------------------------------------------------------------
def _down_fused_kernel(x_ref, w1_ref, b1_ref, w2_ref, b2_ref, o_ref,
                       pad1_ref, pad2_ref, *, compute_dtype, tap1, tap2):
    # x_ref   : (H, W, Cin)            one image (batch dim squeezed)
    # w1_ref  : (9*Cin,  Cout)         im2col-reshaped conv1 weight (HWIO order)
    # w2_ref  : (9*Cout, Cout_pad)     conv2 weight, columns zero-padded to 128k
    # b1_ref  : (1, Cout)   f32        b2_ref: (1, Cout_pad) f32
    # o_ref   : (Ho*Wo, Cout_pad)      lane-dense output slab
    # pad1_ref: (Ho+2, Wo+2, Cin)  f32 VMEM scratch (zero-padded pooled input)
    # pad2_ref: (Ho+2, Wo+2, Cout) f32 VMEM scratch (zero-padded conv1 output)
    Ho, Wo = pad1_ref.shape[0] - 2, pad1_ref.shape[1] - 2
    Cin = pad1_ref.shape[2]
    Cout = pad2_ref.shape[2]

    # Re-initialise the zero halo every grid step: correct under megacore
    # sharding (each core's private scratch gets zeroed) and removes any
    # cross-iteration dependence on scratch persistence.
    # NOTE: zeroing only the 1-wide halo ring is a further refinement; the
    # full fill is negligible here and overlaps the (exposed) input DMA.
    pad1_ref[...] = jnp.zeros_like(pad1_ref)
    pad2_ref[...] = jnp.zeros_like(pad2_ref)

    # ---- MaxPool2d(2), single pass, no transposes --------------------------
    # W (sublane dim): max of even/odd columns via stride-2 reads.
    x_even = x_ref[:, pl.ds(0, Wo, 2), :]                   # (H, Wo, Cin)
    x_odd = x_ref[:, pl.ds(1, Wo, 2), :]                    # (H, Wo, Cin)
    xw = jnp.maximum(x_even, x_odd)
    # H (major dim): split-major reshape (layout-trivial) + max over the pair.
    pooled = jnp.max(xw.reshape(Ho, 2, Wo, Cin), axis=1)    # (Ho, Wo, Cin)

    # ---- 'zeros' padding (padding=1): interior write into zeroed scratch ---
    pad1_ref[pl.ds(1, Ho), pl.ds(1, Wo), :] = pooled.astype(pad1_ref.dtype)

    def conv3x3(pad_ref, w_ref, b_ref, c_src, per_tap):
        """3x3 conv + bias + ReLU from a zero-padded VMEM scratch.

        Weight rows are the 9 taps stacked in (kh, kw, ci) row-major order.
        per_tap=True : nine accumulated K=c_src matmuls (no 9x im2col copy;
                       production path once c_src >= 128 keeps the MXU full).
        per_tap=False: one K=9*c_src im2col matmul (amortises MXU push/drain
                       overhead when c_src is small).
        """
        n_out = w_ref.shape[-1]
        if per_tap:
            acc = jnp.zeros((Ho * Wo, n_out), jnp.float32)
            taps = [(kh, kw) for kh in range(3) for kw in range(3)]
            for t, (kh, kw) in enumerate(taps):
                tap = pad_ref[pl.ds(kh, Ho), pl.ds(kw, Wo), :]
                acc = acc + jnp.dot(
                    tap.reshape(Ho * Wo, c_src).astype(compute_dtype),
                    w_ref[pl.ds(t * c_src, c_src), :],
                    preferred_element_type=jnp.float32)
        else:
            taps = [pad_ref[pl.ds(kh, Ho), pl.ds(kw, Wo), :]
                    for kh in range(3) for kw in range(3)]
            patches = jnp.concatenate(taps, axis=-1).reshape(Ho * Wo, 9 * c_src)
            acc = jnp.dot(patches.astype(compute_dtype), w_ref[...],
                          preferred_element_type=jnp.float32)
        return jnp.maximum(acc + b_ref[...], 0.0)            # f32

    # ---- conv1 + bias + ReLU -> zero-padded scratch for conv2 --------------
    y1 = conv3x3(pad1_ref, w1_ref, b1_ref, Cin, tap1)        # (Ho*Wo, Cout)
    pad2_ref[pl.ds(1, Ho), pl.ds(1, Wo), :] = (
        y1.reshape(Ho, Wo, Cout).astype(pad2_ref.dtype))

    # ---- conv2 + bias + ReLU: lane-dense (column-padded) output ------------
    y2 = conv3x3(pad2_ref, w2_ref, b2_ref, Cout, tap2)       # (Ho*Wo, Cout_pad)
    o_ref[...] = y2.astype(o_ref.dtype)


def _round_up(x, m):
    return ((x + m - 1) // m) * m


# ---------------------------------------------------------------------------
# Wrapper: NCHW <-> NHWC conversion, weight prep (reshape/pad/cast), one call.
# ---------------------------------------------------------------------------
def down_forward(x_nchw, params, compute_dtype=jnp.bfloat16,
                 force_tap_accum=None):
    x = jnp.transpose(x_nchw, (0, 2, 3, 1))                  # NHWC
    n, h, w, cin = x.shape
    assert h % 2 == 0 and w % 2 == 0, "MaxPool2d(2) requires even H, W"
    cout = params["w1"].shape[-1]
    ho, wo = h // 2, w // 2

    # Per-conv matmul strategy: per-tap accumulation once K=C fills the MXU.
    tap1 = force_tap_accum if force_tap_accum is not None else cin >= 128
    tap2 = force_tap_accum if force_tap_accum is not None else cout >= 128

    # Lane-dense output: zero-pad conv2's output columns to a multiple of 128
    # (free in MXU cycles, K untouched); sliced off after the call.
    cout_pad = _round_up(cout, 128)

    # HWIO (kh, kw, ci, co) row-major reshape matches the kernel's tap order;
    # weights pre-cast to the MXU compute dtype (no per-step in-kernel casts).
    w1 = params["w1"].reshape(9 * cin, cout).astype(compute_dtype)
    w2 = params["w2"].reshape(9 * cout, cout)
    w2 = jnp.pad(w2, ((0, 0), (0, cout_pad - cout))).astype(compute_dtype)
    b1 = params["b1"].reshape(1, cout).astype(jnp.float32)
    b2 = jnp.pad(params["b2"].reshape(1, cout),
                 ((0, 0), (0, cout_pad - cout))).astype(jnp.float32)

    flops = 2 * n * ho * wo * 9 * (cin * cout + cout * cout_pad)
    bytes_accessed = int(
        x.size * x.dtype.itemsize
        + (w1.size + w2.size) * jnp.dtype(compute_dtype).itemsize
        + (b1.size + b2.size) * 4
        + n * ho * wo * cout_pad * x.dtype.itemsize)

    out = pl.pallas_call(
        functools.partial(_down_fused_kernel, compute_dtype=compute_dtype,
                          tap1=tap1, tap2=tap2),
        out_shape=jax.ShapeDtypeStruct((n, ho * wo, cout_pad), x.dtype),
        grid=(n,),
        in_specs=[
            pl.BlockSpec((None, h, w, cin), lambda i: (i, 0, 0, 0)),
            pl.BlockSpec((9 * cin, cout), lambda i: (0, 0)),
            pl.BlockSpec((1, cout), lambda i: (0, 0)),
            pl.BlockSpec((9 * cout, cout_pad), lambda i: (0, 0)),
            pl.BlockSpec((1, cout_pad), lambda i: (0, 0)),
        ],
        out_specs=pl.BlockSpec((None, ho * wo, cout_pad), lambda i: (i, 0, 0)),
        scratch_shapes=[
            # f32 scratch keeps the sublane-offset-1 interior stores on plain
            # 32-bit words (no packed sub-word masking); see header note.
            pltpu.VMEM((ho + 2, wo + 2, cin), jnp.float32),
            pltpu.VMEM((ho + 2, wo + 2, cout), jnp.float32),
        ],
        compiler_params=pltpu.CompilerParams(
            dimension_semantics=("parallel",)),
        cost_estimate=pl.CostEstimate(
            flops=flops, transcendentals=0, bytes_accessed=bytes_accessed),
    )(x, w1, b1, w2, b2)

    out = out[:, :, :cout].reshape(n, ho, wo, cout)          # drop lane pad
    return jnp.transpose(out, (0, 3, 1, 2))                  # back to NCHW


# ---------------------------------------------------------------------------
# Pure-JAX reference for verification.
# ---------------------------------------------------------------------------
def down_reference(x_nchw, params):
    x = jnp.transpose(x_nchw, (0, 2, 3, 1))
    x = jax.lax.reduce_window(x, -jnp.inf, jax.lax.max,
                              (1, 2, 2, 1), (1, 2, 2, 1), 'VALID')
    for w, b in ((params["w1"], params["b1"]), (params["w2"], params["b2"])):
        x = jax.lax.conv_general_dilated(
            x, w, window_strides=(1, 1), padding=((1, 1), (1, 1)),
            dimension_numbers=('NHWC', 'HWIO', 'NHWC'),
            precision=jax.lax.Precision.HIGHEST)
        x = jnp.maximum(x + b, 0.0)
    return jnp.transpose(x, (0, 3, 1, 2))


if __name__ == "__main__":
    key = jax.random.PRNGKey(0)
    kx, k1, k2, k3, k4 = jax.random.split(key, 5)

    N, C_in, H, W = 2, 4, 16, 16
    C_out = 8

    x = jax.random.normal(kx, (N, C_in, H, W), jnp.float32)
    # Weights stored HWIO = (kh, kw, in_ch, out_ch); equivalent to a transposed
    # PyTorch (out_ch, in_ch, kh, kw) Conv2d weight.
    params = {
        "w1": 0.1 * jax.random.normal(k1, (3, 3, C_in, C_out), jnp.float32),
        "b1": 0.1 * jax.random.normal(k2, (C_out,), jnp.float32),
        "w2": 0.1 * jax.random.normal(k3, (3, 3, C_out, C_out), jnp.float32),
        "b2": 0.1 * jax.random.normal(k4, (C_out,), jnp.float32),
    }

    ref = down_reference(x, params)

    # f32 MXU path, single-matmul im2col (small-C fast path): tight check.
    out_f32 = jax.block_until_ready(jax.jit(functools.partial(
        down_forward, compute_dtype=jnp.float32,
        force_tap_accum=False))(x, params))
    assert out_f32.shape == (N, C_out, H // 2, W // 2), out_f32.shape
    assert jnp.allclose(out_f32, ref, atol=5e-3, rtol=5e-3), \
        float(jnp.max(jnp.abs(out_f32 - ref)))

    # f32 MXU path, per-tap accumulation (production-C path): tight check.
    out_tap = jax.block_until_ready(jax.jit(functools.partial(
        down_forward, compute_dtype=jnp.float32,
        force_tap_accum=True))(x, params))
    assert out_tap.shape == (N, C_out, H // 2, W // 2), out_tap.shape
    assert jnp.allclose(out_tap, ref, atol=5e-3, rtol=5e-3), \
        float(jnp.max(jnp.abs(out_tap - ref)))

    # Default path: bf16 MXU operands, f32 accumulation (v6e/v7x throughput).
    out_bf16 = jax.block_until_ready(jax.jit(down_forward)(x, params))
    assert out_bf16.shape == (N, C_out, H // 2, W // 2), out_bf16.shape
    assert jnp.allclose(out_bf16, ref, atol=5e-2, rtol=5e-2), \
        float(jnp.max(jnp.abs(out_bf16 - ref)))

    print("KERNEL_OK")
</pallas_src>

<mosaic_0001>
module attributes {stable_mosaic.version = 11 : i64} {
  func.func @_down_fused_kernel(%arg0: i32, %arg1: memref<1x16x16x4xf32, #tpu.memory_space<vmem>>, %arg2: memref<36x8xf32, #tpu.memory_space<vmem>>, %arg3: memref<1x8xf32, #tpu.memory_space<vmem>>, %arg4: memref<72x128xf32, #tpu.memory_space<vmem>>, %arg5: memref<1x128xf32, #tpu.memory_space<vmem>>, %arg6: memref<1x64x128xf32, #tpu.memory_space<vmem>>, %arg7: memref<10x10x4xf32, #tpu.memory_space<vmem>>, %arg8: memref<10x10x8xf32, #tpu.memory_space<vmem>>) attributes {dimension_semantics = [#tpu.dimension_semantics<parallel>], iteration_bounds = array<i64: 2>, scalar_prefetch = 0 : i64, scratch_operands = 2 : i64, tpu.core_type = #tpu.core_type<tc>, window_params = [{transform_indices = @transform_0, window_bounds = array<i64: 1, 16, 16, 4>}, {pipeline_mode = #tpu.pipeline_mode<synchronous>, transform_indices = @transform_1, window_bounds = array<i64: 36, 8>}, {pipeline_mode = #tpu.pipeline_mode<synchronous>, transform_indices = @transform_2, window_bounds = array<i64: 1, 8>}, {pipeline_mode = #tpu.pipeline_mode<synchronous>, transform_indices = @transform_3, window_bounds = array<i64: 72, 128>}, {pipeline_mode = #tpu.pipeline_mode<synchronous>, transform_indices = @transform_4, window_bounds = array<i64: 1, 128>}, {transform_indices = @transform_5, window_bounds = array<i64: 1, 64, 128>}]} {
    %cst = arith.constant 0.000000e+00 : f32
    %0 = vector.broadcast %cst : f32 to vector<10x10x4xf32>
    %c0 = arith.constant 0 : index
    %c0_0 = arith.constant 0 : index
    %c0_1 = arith.constant 0 : index
    %1 = vector.load %arg7[%c0, %c0_0, %c0_1] : memref<10x10x4xf32, #tpu.memory_space<vmem>>, vector<10x10x4xf32>
    tpu.vector_store %arg7[%c0, %c0_0, %c0_1], %0 {strides = array<i32>} : memref<10x10x4xf32, #tpu.memory_space<vmem>>, vector<10x10x4xf32>,
    %cst_2 = arith.constant 0.000000e+00 : f32
    %2 = vector.broadcast %cst_2 : f32 to vector<10x10x8xf32>
    %c0_3 = arith.constant 0 : index
    %c0_4 = arith.constant 0 : index
    %c0_5 = arith.constant 0 : index
    %3 = vector.load %arg8[%c0_3, %c0_4, %c0_5] : memref<10x10x8xf32, #tpu.memory_space<vmem>>, vector<10x10x8xf32>
    tpu.vector_store %arg8[%c0_3, %c0_4, %c0_5], %2 {strides = array<i32>} : memref<10x10x8xf32, #tpu.memory_space<vmem>>, vector<10x10x8xf32>,
    %c0_6 = arith.constant 0 : index
    %c0_7 = arith.constant 0 : index
    %c0_8 = arith.constant 0 : index
    %c0_9 = arith.constant 0 : index
    %4 = tpu.strided_load %arg1[%c0_6, %c0_7, %c0_8, %c0_9] {strides = array<i32: 1, 1, 2, 1>} : memref<1x16x16x4xf32, #tpu.memory_space<vmem>>, vector<1x16x8x4xf32>
    %5 = vector.shape_cast %4 : vector<1x16x8x4xf32> to vector<16x8x4xf32>
    %c0_10 = arith.constant 0 : index
    %c0_11 = arith.constant 0 : index
    %c1 = arith.constant 1 : index
    %c0_12 = arith.constant 0 : index
    %6 = tpu.strided_load %arg1[%c0_10, %c0_11, %c1, %c0_12] {strides = array<i32: 1, 1, 2, 1>} : memref<1x16x16x4xf32, #tpu.memory_space<vmem>>, vector<1x16x8x4xf32>
    %7 = vector.shape_cast %6 : vector<1x16x8x4xf32> to vector<16x8x4xf32>
    %8 = arith.maximumf %5, %7 : vector<16x8x4xf32>
    %9 = vector.shape_cast %8 : vector<16x8x4xf32> to vector<8x2x8x4xf32>
    %cst_13 = arith.constant dense<0xFF800000> : vector<8x8x4xf32>
    %10 = vector.multi_reduction <maximumf>, %9, %cst_13 [1] : vector<8x2x8x4xf32> to vector<8x8x4xf32>
    %c1_14 = arith.constant 1 : index
    %c1_15 = arith.constant 1 : index
    %c0_16 = arith.constant 0 : index
    %11 = vector.load %arg7[%c1_14, %c1_15, %c0_16] : memref<10x10x4xf32, #tpu.memory_space<vmem>>, vector<8x8x4xf32>
    tpu.vector_store %arg7[%c1_14, %c1_15, %c0_16], %10 {strides = array<i32>} : memref<10x10x4xf32, #tpu.memory_space<vmem>>, vector<8x8x4xf32>,
    %c0_17 = arith.constant 0 : index
    %c0_18 = arith.constant 0 : index
    %c0_19 = arith.constant 0 : index
    %12 = vector.load %arg7[%c0_17, %c0_18, %c0_19] : memref<10x10x4xf32, #tpu.memory_space<vmem>>, vector<8x8x4xf32>
    %c0_20 = arith.constant 0 : index
    %c1_21 = arith.constant 1 : index
    %c0_22 = arith.constant 0 : index
    %13 = vector.load %arg7[%c0_20, %c1_21, %c0_22] : memref<10x10x4xf32, #tpu.memory_space<vmem>>, vector<8x8x4xf32>
    %c0_23 = arith.constant 0 : index
    %c2 = arith.constant 2 : index
    %c0_24 = arith.constant 0 : index
    %14 = vector.load %arg7[%c0_23, %c2, %c0_24] : memref<10x10x4xf32, #tpu.memory_space<vmem>>, vector<8x8x4xf32>
    %c1_25 = arith.constant 1 : index
    %c0_26 = arith.constant 0 : index
    %c0_27 = arith.constant 0 : index
    %15 = vector.load %arg7[%c1_25, %c0_26, %c0_27] : memref<10x10x4xf32, #tpu.memory_space<vmem>>, vector<8x8x4xf32>
    %c1_28 = arith.constant 1 : index
    %c1_29 = arith.constant 1 : index
    %c0_30 = arith.constant 0 : index
    %16 = vector.load %arg7[%c1_28, %c1_29, %c0_30] : memref<10x10x4xf32, #tpu.memory_space<vmem>>, vector<8x8x4xf32>
    %c1_31 = arith.constant 1 : index
    %c2_32 = arith.constant 2 : index
    %c0_33 = arith.constant 0 : index
    %17 = vector.load %arg7[%c1_31, %c2_32, %c0_33] : memref<10x10x4xf32, #tpu.memory_space<vmem>>, vector<8x8x4xf32>
    %c2_34 = arith.constant 2 : index
    %c0_35 = arith.constant 0 : index
    %c0_36 = arith.constant 0 : index
    %18 = vector.load %arg7[%c2_34, %c0_35, %c0_36] : memref<10x10x4xf32, #tpu.memory_space<vmem>>, vector<8x8x4xf32>
    %c2_37 = arith.constant 2 : index
    %c1_38 = arith.constant 1 : index
    %c0_39 = arith.constant 0 : index
    %19 = vector.load %arg7[%c2_37, %c1_38, %c0_39] : memref<10x10x4xf32, #tpu.memory_space<vmem>>, vector<8x8x4xf32>
    %c2_40 = arith.constant 2 : index
    %c2_41 = arith.constant 2 : index
    %c0_42 = arith.constant 0 : index
    %20 = vector.load %arg7[%c2_40, %c2_41, %c0_42] : memref<10x10x4xf32, #tpu.memory_space<vmem>>, vector<8x8x4xf32>
    %21 = tpu.concatenate %12, %13, %14, %15, %16, %17, %18, %19, %20 in 2 : vector<8x8x4xf32>, vector<8x8x4xf32>, vector<8x8x4xf32>, vector<8x8x4xf32>, vector<8x8x4xf32>, vector<8x8x4xf32>, vector<8x8x4xf32>, vector<8x8x4xf32>, vector<8x8x4xf32> -> vector<8x8x36xf32>
    %22 = vector.shape_cast %21 : vector<8x8x36xf32> to vector<64x36xf32>
    %c0_43 = arith.constant 0 : index
    %c0_44 = arith.constant 0 : index
    %23 = vector.load %arg2[%c0_43, %c0_44] : memref<36x8xf32, #tpu.memory_space<vmem>>, vector<36x8xf32>
    %cst_45 = arith.constant dense<0.000000e+00> : vector<64x8xf32>
    %24 = tpu.matmul %22, %23, %cst_45 {dimension_numbers = #tpu.dot_dimension_numbers<[1], [0], [0], [1], [0, 0, 1, 1], [], []>} : vector<64x36xf32>, vector<36x8xf32>, vector<64x8xf32> -> vector<64x8xf32>
    %c0_46 = arith.constant 0 : index
    %c0_47 = arith.constant 0 : index
    %25 = vector.load %arg3[%c0_46, %c0_47] : memref<1x8xf32, #tpu.memory_space<vmem>>, vector<1x8xf32>
    %26 = vector.broadcast %25 : vector<1x8xf32> to vector<64x8xf32>
    %27 = arith.addf %24, %26 : vector<64x8xf32>
    %cst_48 = arith.constant 0.000000e+00 : f32
    %28 = vector.broadcast %cst_48 : f32 to vector<64x8xf32>
    %29 = arith.maximumf %27, %28 : vector<64x8xf32>
    %30 = vector.shape_cast %29 : vector<64x8xf32> to vector<8x8x8xf32>
    %c1_49 = arith.constant 1 : index
    %c1_50 = arith.constant 1 : index
    %c0_51 = arith.constant 0 : index
    %31 = vector.load %arg8[%c1_49, %c1_50, %c0_51] : memref<10x10x8xf32, #tpu.memory_space<vmem>>, vector<8x8x8xf32>
    tpu.vector_store %arg8[%c1_49, %c1_50, %c0_51], %30 {strides = array<i32>} : memref<10x10x8xf32, #tpu.memory_space<vmem>>, vector<8x8x8xf32>,
    %c0_52 = arith.constant 0 : index
    %c0_53 = arith.constant 0 : index
    %c0_54 = arith.constant 0 : index
    %32 = vector.load %arg8[%c0_52, %c0_53, %c0_54] : memref<10x10x8xf32, #tpu.memory_space<vmem>>, vector<8x8x8xf32>
    %c0_55 = arith.constant 0 : index
    %c1_56 = arith.constant 1 : index
    %c0_57 = arith.constant 0 : index
    %33 = vector.load %arg8[%c0_55, %c1_56, %c0_57] : memref<10x10x8xf32, #tpu.memory_space<vmem>>, vector<8x8x8xf32>
    %c0_58 = arith.constant 0 : index
    %c2_59 = arith.constant 2 : index
    %c0_60 = arith.constant 0 : index
    %34 = vector.load %arg8[%c0_58, %c2_59, %c0_60] : memref<10x10x8xf32, #tpu.memory_space<vmem>>, vector<8x8x8xf32>
    %c1_61 = arith.constant 1 : index
    %c0_62 = arith.constant 0 : index
    %c0_63 = arith.constant 0 : index
    %35 = vector.load %arg8[%c1_61, %c0_62, %c0_63] : memref<10x10x8xf32, #tpu.memory_space<vmem>>, vector<8x8x8xf32>
    %c1_64 = arith.constant 1 : index
    %c1_65 = arith.constant 1 : index
    %c0_66 = arith.constant 0 : index
    %36 = vector.load %arg8[%c1_64, %c1_65, %c0_66] : memref<10x10x8xf32, #tpu.memory_space<vmem>>, vector<8x8x8xf32>
    %c1_67 = arith.constant 1 : index
    %c2_68 = arith.constant 2 : index
    %c0_69 = arith.constant 0 : index
    %37 = vector.load %arg8[%c1_67, %c2_68, %c0_69] : memref<10x10x8xf32, #tpu.memory_space<vmem>>, vector<8x8x8xf32>
    %c2_70 = arith.constant 2 : index
    %c0_71 = arith.constant 0 : index
    %c0_72 = arith.constant 0 : index
    %38 = vector.load %arg8[%c2_70, %c0_71, %c0_72] : memref<10x10x8xf32, #tpu.memory_space<vmem>>, vector<8x8x8xf32>
    %c2_73 = arith.constant 2 : index
    %c1_74 = arith.constant 1 : index
    %c0_75 = arith.constant 0 : index
    %39 = vector.load %arg8[%c2_73, %c1_74, %c0_75] : memref<10x10x8xf32, #tpu.memory_space<vmem>>, vector<8x8x8xf32>
    %c2_76 = arith.constant 2 : index
    %c2_77 = arith.constant 2 : index
    %c0_78 = arith.constant 0 : index
    %40 = vector.load %arg8[%c2_76, %c2_77, %c0_78] : memref<10x10x8xf32, #tpu.memory_space<vmem>>, vector<8x8x8xf32>
    %41 = tpu.concatenate %32, %33, %34, %35, %36, %37, %38, %39, %40 in 2 : vector<8x8x8xf32>, vector<8x8x8xf32>, vector<8x8x8xf32>, vector<8x8x8xf32>, vector<8x8x8xf32>, vector<8x8x8xf32>, vector<8x8x8xf32>, vector<8x8x8xf32>, vector<8x8x8xf32> -> vector<8x8x72xf32>
    %42 = vector.shape_cast %41 : vector<8x8x72xf32> to vector<64x72xf32>
    %c0_79 = arith.constant 0 : index
    %c0_80 = arith.constant 0 : index
    %43 = vector.load %arg4[%c0_79, %c0_80] : memref<72x128xf32, #tpu.memory_space<vmem>>, vector<72x128xf32>
    %cst_81 = arith.constant dense<0.000000e+00> : vector<64x128xf32>
    %44 = tpu.matmul %42, %43, %cst_81 {dimension_numbers = #tpu.dot_dimension_numbers<[1], [0], [0], [1], [0, 0, 1, 1], [], []>} : vector<64x72xf32>, vector<72x128xf32>, vector<64x128xf32> -> vector<64x128xf32>
    %c0_82 = arith.constant 0 : index
    %c0_83 = arith.constant 0 : index
    %45 = vector.load %arg5[%c0_82, %c0_83] : memref<1x128xf32, #tpu.memory_space<vmem>>, vector<1x128xf32>
    %46 = vector.broadcast %45 : vector<1x128xf32> to vector<64x128xf32>
    %47 = arith.addf %44, %46 : vector<64x128xf32>
    %cst_84 = arith.constant 0.000000e+00 : f32
    %48 = vector.broadcast %cst_84 : f32 to vector<64x128xf32>
    %49 = arith.maximumf %47, %48 : vector<64x128xf32>
    %c0_85 = arith.constant 0 : index
    %c0_86 = arith.constant 0 : index
    %c0_87 = arith.constant 0 : index
    %50 = vector.load %arg6[%c0_85, %c0_86, %c0_87] : memref<1x64x128xf32, #tpu.memory_space<vmem>>, vector<1x64x128xf32>
    %51 = vector.shape_cast %50 : vector<1x64x128xf32> to vector<64x128xf32>
    %52 = vector.shape_cast %49 : vector<64x128xf32> to vector<1x64x128xf32>
    tpu.vector_store %arg6[%c0_85, %c0_86, %c0_87], %52 {strides = array<i32>} : memref<1x64x128xf32, #tpu.memory_space<vmem>>, vector<1x64x128xf32>,
    return
  }
  func.func @transform_0(%arg0: i32) -> (i32, i32, i32, i32) {
    %c0_i32 = arith.constant 0 : i32
    %c0_i32_0 = arith.constant 0 : i32
    %c0_i32_1 = arith.constant 0 : i32
    %c0_i32_2 = arith.constant 0 : i32
    return %arg0, %c0_i32, %c0_i32_0, %c0_i32_1 : i32, i32, i32, i32
  }
  func.func @transform_1(%arg0: i32) -> (i32, i32) {
    %c0_i32 = arith.constant 0 : i32
    %c0_i32_0 = arith.constant 0 : i32
    %c0_i32_1 = arith.constant 0 : i32
    return %c0_i32, %c0_i32_0 : i32, i32
  }
  func.func @transform_2(%arg0: i32) -> (i32, i32) {
    %c0_i32 = arith.constant 0 : i32
    %c0_i32_0 = arith.constant 0 : i32
    %c0_i32_1 = arith.constant 0 : i32
    return %c0_i32, %c0_i32_0 : i32, i32
  }
  func.func @transform_3(%arg0: i32) -> (i32, i32) {
    %c0_i32 = arith.constant 0 : i32
    %c0_i32_0 = arith.constant 0 : i32
    %c0_i32_1 = arith.constant 0 : i32
    return %c0_i32, %c0_i32_0 : i32, i32
  }
  func.func @transform_4(%arg0: i32) -> (i32, i32) {
    %c0_i32 = arith.constant 0 : i32
    %c0_i32_0 = arith.constant 0 : i32
    %c0_i32_1 = arith.constant 0 : i32
    return %c0_i32, %c0_i32_0 : i32, i32
  }
  func.func @transform_5(%arg0: i32) -> (i32, i32, i32) {
    %c0_i32 = arith.constant 0 : i32
    %c0_i32_0 = arith.constant 0 : i32
    %c0_i32_1 = arith.constant 0 : i32
    return %arg0, %c0_i32, %c0_i32_0 : i32, i32, i32
  }
}

</mosaic_0001>

<llo_original>
// kernel: down_forward.1
$region0: #{down_forward.1}
  #allocation0 [shape = 'u32[]', space=smem, size = 0x4, offset = 0x4, fixed_abs, tag = 'smem constant byte address 0x4 - core index']
  #allocation1 [shape = 'u32[144,128]{1,0:T(1,128)}', space=vmem, size = 0x12000, scoped, tag = 'internal scratch']
  #allocation2 [shape = 'f32[10,10,4]{2,1,0:T(8,128)}', space=vmem, size = 0x14000, scoped, tag = 'scratch operand']
  #allocation3 [shape = 'f32[10,10,8]{2,1,0:T(8,128)}', space=vmem, size = 0x14000, scoped, tag = 'scratch operand']
  %s0 = inlined_call_operand.vmem [shape: f32[2,16,16,4], index: 0, kind: input, shape index: {}]
  %s1 = inlined_call_operand.vmem [shape: f32[36,8], index: 1, kind: input, shape index: {}]
  %s2 = inlined_call_operand.vmem [shape: f32[1,8], index: 2, kind: input, shape index: {}]
  %s3 = inlined_call_operand.vmem [shape: f32[72,128], index: 3, kind: input, shape index: {}]
  %s4 = inlined_call_operand.vmem [shape: f32[1,128], index: 4, kind: input, shape index: {}]
  %s5 = inlined_call_operand.vmem [shape: f32[2,64,128], index: 5, kind: output, shape index: {}]
  %s6 = sld [smem:[#allocation0]]
  $region53: #{down_forward.1} parent=0
    _
  %s8 = ssub.s32 1, %s6
  %s9 = scalar_select 0, %s8, %s6
  loop: start=0, step=1, limit=4
  $region2: #{down_forward.1} parent=0 // loop_pre_header
    _
  $region3: #{down_forward.1} parent=0 // loop_header
    %s11 = sphi 0, %s15
    %p12 = scmp.ge.s32.totalorder %s11, 4
    %s21 = sphi 0, %s23
    %s24 = sphi 0, %s21
    %s25 = sphi 0, %s24
    %s41 = sphi 0, %s25
    %s45 = sphi 0, %s45
    %s47 = sphi 0, %s45
    %s48 = sphi 0, %s47
    %s62 = sphi 0, %s48
    %s66 = sphi 0, %s66
    %s68 = sphi 0, %s66
    %s69 = sphi 0, %s68
    %s83 = sphi 0, %s69
    %s87 = sphi 0, %s87
    %s89 = sphi 0, %s87
    %s90 = sphi 0, %s89
    %s104 = sphi 0, %s90
    %s108 = sphi 0, %s108
    %s110 = sphi 0, %s108
    %s111 = sphi 0, %s110
    %s125 = sphi 0, %s111
    %s131 = sphi 0, %s133
    %s134 = sphi 0, %s131
    %s135 = sphi 0, %s134
    %s151 = sphi 0, %s135
  $region4: #{down_forward.1} parent=0 // loop_header_branch
    %14 = sbr.rel (%p12) target = $region8
  $region5: #{down_forward.1} parent=0 // loop_body
    %s16 = ssub.s32 %s11, 1
    %s17 = ssub.s32 %s11, 2
    %s18 = sadd.s32 %s11, 1
    %s19 = ssub.s32 %s11, %s18
    %p20 = scmp.eq.s32.totalorder %s19, 0
    %s22 = sadd.s32 %s21, 1
    %s23 = scalar_select %p20, %s21, %s22
    %p26 = pneg %p20
    %p27 = scmp.eq.s32.totalorder %s11, 1
    %p28 = por %p26, %p27
    %p29 = scmp.ne.s32.totalorder %s21, %s24
    %p30 = scmp.eq.s32.totalorder %s11, 0
    %p31 = por %p29, %p30
    %p32 = scmp.ne.s32.totalorder %s21, %s24
    %p33 = scmp.eq.s32.totalorder %s16, 1
    %p34 = por %p32, %p33
    %p35 = scmp.ne.s32.totalorder %s24, %s25
    %p36 = scmp.eq.s32.totalorder %s16, 0
    %p37 = por %p35, %p36
    %p38 = scmp.ne.s32.totalorder %s24, %s25
    %p39 = scmp.eq.s32.totalorder %s17, 1
    %p40 = por %p38, %p39
    %p42 = scmp.ne.s32.totalorder %s25, %s41
    %p43 = scmp.eq.s32.totalorder %s17, 0
    %p44 = por %p42, %p43
    %s46 = sadd.s32 %s45, 1
    %p49 = scmp.eq.s32.totalorder %s11, 1
    %p50 = scmp.ne.s32.totalorder %s45, %s47
    %p51 = scmp.eq.s32.totalorder %s11, 0
    %p52 = por %p50, %p51
    %p53 = scmp.ne.s32.totalorder %s45, %s47
    %p54 = scmp.eq.s32.totalorder %s16, 1
    %p55 = por %p53, %p54
    %p56 = scmp.ne.s32.totalorder %s47, %s48
    %p57 = scmp.eq.s32.totalorder %s16, 0
    %p58 = por %p56, %p57
    %p59 = scmp.ne.s32.totalorder %s47, %s48
    %p60 = scmp.eq.s32.totalorder %s17, 1
    %p61 = por %p59, %p60
    %p63 = scmp.ne.s32.totalorder %s48, %s62
    %p64 = scmp.eq.s32.totalorder %s17, 0
    %p65 = por %p63, %p64
    %s67 = sadd.s32 %s66, 1
    %p70 = scmp.eq.s32.totalorder %s11, 1
    %p71 = scmp.ne.s32.totalorder %s66, %s68
    %p72 = scmp.eq.s32.totalorder %s11, 0
    %p73 = por %p71, %p72
    %p74 = scmp.ne.s32.totalorder %s66, %s68
    %p75 = scmp.eq.s32.totalorder %s16, 1
    %p76 = por %p74, %p75
    %p77 = scmp.ne.s32.totalorder %s68, %s69
    %p78 = scmp.eq.s32.totalorder %s16, 0
    %p79 = por %p77, %p78
    %p80 = scmp.ne.s32.totalorder %s68, %s69
    %p81 = scmp.eq.s32.totalorder %s17, 1
    %p82 = por %p80, %p81
    %p84 = scmp.ne.s32.totalorder %s69, %s83
    %p85 = scmp.eq.s32.totalorder %s17, 0
    %p86 = por %p84, %p85
    %s88 = sadd.s32 %s87, 1
    %p91 = scmp.eq.s32.totalorder %s11, 1
    %p92 = scmp.ne.s32.totalorder %s87, %s89
    %p93 = scmp.eq.s32.totalorder %s11, 0
    %p94 = por %p92, %p93
    %p95 = scmp.ne.s32.totalorder %s87, %s89
    %p96 = scmp.eq.s32.totalorder %s16, 1
    %p97 = por %p95, %p96
    %p98 = scmp.ne.s32.totalorder %s89, %s90
    %p99 = scmp.eq.s32.totalorder %s16, 0
    %p100 = por %p98, %p99
    %p101 = scmp.ne.s32.totalorder %s89, %s90
    %p102 = scmp.eq.s32.totalorder %s17, 1
    %p103 = por %p101, %p102
    %p105 = scmp.ne.s32.totalorder %s90, %s104
    %p106 = scmp.eq.s32.totalorder %s17, 0
    %p107 = por %p105, %p106
    %s109 = sadd.s32 %s108, 1
    %p112 = scmp.eq.s32.totalorder %s11, 1
    %p113 = scmp.ne.s32.totalorder %s108, %s110
    %p114 = scmp.eq.s32.totalorder %s11, 0
    %p115 = por %p113, %p114
    %p116 = scmp.ne.s32.totalorder %s108, %s110
    %p117 = scmp.eq.s32.totalorder %s16, 1
    %p118 = por %p116, %p117
    %p119 = scmp.ne.s32.totalorder %s110, %s111
    %p120 = scmp.eq.s32.totalorder %s16, 0
    %p121 = por %p119, %p120
    %p122 = scmp.ne.s32.totalorder %s110, %s111
    %p123 = scmp.eq.s32.totalorder %s17, 1
    %p124 = por %p122, %p123
    %p126 = scmp.ne.s32.totalorder %s111, %s125
    %p127 = scmp.eq.s32.totalorder %s17, 0
    %p128 = por %p126, %p127
    %s129 = ssub.s32 %s11, %s18
    %p130 = scmp.eq.s32.totalorder %s129, 0
    %s132 = sadd.s32 %s131, 1
    %s133 = scalar_select %p130, %s131, %s132
    %p136 = pneg %p130
    %p137 = scmp.eq.s32.totalorder %s11, 1
    %p138 = por %p136, %p137
    %p139 = scmp.ne.s32.totalorder %s131, %s134
    %p140 = scmp.eq.s32.totalorder %s11, 0
    %p141 = por %p139, %p140
    %p142 = scmp.ne.s32.totalorder %s131, %s134
    %p143 = scmp.eq.s32.totalorder %s16, 1
    %p144 = por %p142, %p143
    %p145 = scmp.ne.s32.totalorder %s134, %s135
    %p146 = scmp.eq.s32.totalorder %s16, 0
    %p147 = por %p145, %p146
    %p148 = scmp.ne.s32.totalorder %s134, %s135
    %p149 = scmp.eq.s32.totalorder %s17, 1
    %p150 = por %p148, %p149
    %p152 = scmp.ne.s32.totalorder %s135, %s151
    %p153 = scmp.eq.s32.totalorder %s17, 0
    %p154 = por %p152, %p153
    %p155 = scmp.le.s32.totalorder 1, %s11
    %p156 = scmp.lt.s32.totalorder %s11, 3
    %p157 = pnand %p155, %p156
    %p158 = pneg %p157
    // Predicated region
    $region9: #{down_forward.1} parent=5 // pred_check
      _
    $region10: #{down_forward.1} parent=5 // pred_check_branch
      %160 = sbr.rel (%p157) target = $region12
    $region11: #{down_forward.1} parent=5 // pred_region
      %s161 = ssub.s32 %s11, 1
      // Predicated region
      $region13: #{down_forward.1} parent=11 // pred_check
        %p162 = pneg %p58
      $region14: #{down_forward.1} parent=11 // pred_check_branch
        %164 = sbr.rel (%p162) target = $region16
      $region15: #{down_forward.1} parent=11 // pred_region
        _
      $region16: #{down_forward.1} parent=11 // pred_fallthru
        _
      // Predicated region
      $region17: #{down_forward.1} parent=11 // pred_check
        %p165 = pneg %p79
      $region18: #{down_forward.1} parent=11 // pred_check_branch
        %167 = sbr.rel (%p165) target = $region20
      $region19: #{down_forward.1} parent=11 // pred_region
        _
      $region20: #{down_forward.1} parent=11 // pred_fallthru
        _
      // Predicated region
      $region21: #{down_forward.1} parent=11 // pred_check
        %p168 = pneg %p100
      $region22: #{down_forward.1} parent=11 // pred_check_branch
        %170 = sbr.rel (%p168) target = $region24
      $region23: #{down_forward.1} parent=11 // pred_region
        _
      $region24: #{down_forward.1} parent=11 // pred_fallthru
        _
      // Predicated region
      $region25: #{down_forward.1} parent=11 // pred_check
        %p171 = pneg %p121
      $region26: #{down_forward.1} parent=11 // pred_check_branch
        %173 = sbr.rel (%p171) target = $region28
      $region27: #{down_forward.1} parent=11 // pred_region
        _
      $region28: #{down_forward.1} parent=11 // pred_fallthru
        _
    $region12: #{down_forward.1} parent=5 // pred_fallthru
      _
    %p174 = scmp.lt.s32.totalorder %s11, 2
    // Predicated region
    $region29: #{down_forward.1} parent=5 // pred_check
      %p175 = pneg %p174
    $region30: #{down_forward.1} parent=5 // pred_check_branch
      %177 = sbr.rel (%p175) target = $region32
    $region31: #{down_forward.1} parent=5 // pred_region
      // Predicated region
      $region33: #{down_forward.1} parent=31 // pred_check
        %p178 = pneg %p31
      $region34: #{down_forward.1} parent=31 // pred_check_branch
        %180 = sbr.rel (%p178) target = $region36
      $region35: #{down_forward.1} parent=31 // pred_region
        %p181 = scmp.lt.s32.totalorder %s11, 1
        %s182 = scalar_select %p181, %s11, 1
        %s183 = smul.addr %s182, 32
        %s184 = smul.addr %s183, 8
        %s185 = scalar_lea.vmem %s0, %s184
      $region36: #{down_forward.1} parent=31 // pred_fallthru
        _
    $region32: #{down_forward.1} parent=5 // pred_fallthru
      _
    %p186 = scmp.le.s32.totalorder 1, %s11
    %p187 = scmp.lt.s32.totalorder %s11, 3
    %p188 = pnand %p186, %p187
    %p189 = pneg %p188
    // Predicated region
    $region37: #{down_forward.1} parent=5 // pred_check
      _
    $region38: #{down_forward.1} parent=5 // pred_check_branch
      %191 = sbr.rel (%p188) target = $region40
    $region39: #{down_forward.1} parent=5 // pred_region
      %s192 = ssub.s32 %s11, 1
      %p193 = scmp.lt.s32.totalorder %s16, 1
      %s194 = scalar_select %p193, %s16, 1
      %s195 = smul.addr %s194, 32
      %s196 = smul.addr %s195, 8
      %s197 = scalar_lea.vmem %s0, %s196
      %p198 = pneg %p37
      %p199 = pneg %p34
      %p200 = pneg %p58
      %p201 = pneg %p55
      %p202 = pneg %p79
      %p203 = pneg %p76
      %p204 = pneg %p100
      %p205 = pneg %p97
      %p206 = pneg %p121
      %p207 = pneg %p118
      %p208 = pneg %p147
      %p209 = pneg %p144
      %p210 = scmp.lt.s32.totalorder %s16, 1
      %s211 = scalar_select %p210, %s16, 1
      %s212 = smul.addr %s211, 8
      %s213 = smul.addr %s212, 8
      %s214 = scalar_lea.vmem %s5, %s213
      %p215 = scmp.lt.s32.totalorder %s16, 1
      %s216 = scalar_select %p215, %s16, 1
      %s217 = smul.addr %s216, 32
      %s218 = smul.addr %s217, 8
      %s219 = scalar_lea.vmem %s0, %s218
      %p220 = scmp.lt.s32.totalorder %s16, 1
      %s221 = scalar_select %p220, %s16, 1
      %s222 = smul.addr %s221, 8
      %s223 = smul.addr %s222, 8
      %s224 = scalar_lea.vmem %s5, %s223
      %vm225 = vcmask 31744
      %226 = vst.msk [vmem:[#allocation2] sm:$0xff] %vm225, 0.0
      %vm227 = vcmask 25600
      %228 = vst.msk [vmem:[#allocation2 + $0x8] sm:$0x3] %vm227, 0.0
      %229 = vst.msk [vmem:[#allocation2 + $0x10] sm:$0xff] %vm225, 0.0
      %230 = vst.msk [vmem:[#allocation2 + $0x18] sm:$0x3] %vm227, 0.0
      %231 = vst.msk [vmem:[#allocation2 + $0x20] sm:$0xff] %vm225, 0.0
      %232 = vst.msk [vmem:[#allocation2 + $0x28] sm:$0x3] %vm227, 0.0
      %233 = vst.msk [vmem:[#allocation2 + $0x30] sm:$0xff] %vm225, 0.0
      %234 = vst.msk [vmem:[#allocation2 + $0x38] sm:$0x3] %vm227, 0.0
      %235 = vst.msk [vmem:[#allocation2 + $0x40] sm:$0xff] %vm225, 0.0
      %236 = vst.msk [vmem:[#allocation2 + $0x48] sm:$0x3] %vm227, 0.0
      %237 = vst.msk [vmem:[#allocation2 + $0x50] sm:$0xff] %vm225, 0.0
      %238 = vst.msk [vmem:[#allocation2 + $0x58] sm:$0x3] %vm227, 0.0
      %239 = vst.msk [vmem:[#allocation2 + $0x60] sm:$0xff] %vm225, 0.0
      %240 = vst.msk [vmem:[#allocation2 + $0x68] sm:$0x3] %vm227, 0.0
      %241 = vst.msk [vmem:[#allocation2 + $0x70] sm:$0xff] %vm225, 0.0
      %242 = vst.msk [vmem:[#allocation2 + $0x78] sm:$0x3] %vm227, 0.0
      %243 = vst.msk [vmem:[#allocation2 + $0x80] sm:$0xff] %vm225, 0.0
      %244 = vst.msk [vmem:[#allocation2 + $0x88] sm:$0x3] %vm227, 0.0
      %245 = vst.msk [vmem:[#allocation2 + $0x90] sm:$0xff] %vm225, 0.0
      %246 = vst.msk [vmem:[#allocation2 + $0x98] sm:$0x3] %vm227, 0.0
      %vm247 = vcmask 64512
      %248 = vst.msk [vmem:[#allocation3] sm:$0xff] %vm247, 0.0
      %vm249 = vcmask 58368
      %250 = vst.msk [vmem:[#allocation3 + $0x8] sm:$0x3] %vm249, 0.0
      %251 = vst.msk [vmem:[#allocation3 + $0x10] sm:$0xff] %vm247, 0.0
      %252 = vst.msk [vmem:[#allocation3 + $0x18] sm:$0x3] %vm249, 0.0
      %253 = vst.msk [vmem:[#allocation3 + $0x20] sm:$0xff] %vm247, 0.0
      %254 = vst.msk [vmem:[#allocation3 + $0x28] sm:$0x3] %vm249, 0.0
      %255 = vst.msk [vmem:[#allocation3 + $0x30] sm:$0xff] %vm247, 0.0
      %256 = vst.msk [vmem:[#allocation3 + $0x38] sm:$0x3] %vm249, 0.0
      %257 = vst.msk [vmem:[#allocation3 + $0x40] sm:$0xff] %vm247, 0.0
      %258 = vst.msk [vmem:[#allocation3 + $0x48] sm:$0x3] %vm249, 0.0
      %259 = vst.msk [vmem:[#allocation3 + $0x50] sm:$0xff] %vm247, 0.0
      %260 = vst.msk [vmem:[#allocation3 + $0x58] sm:$0x3] %vm249, 0.0
      %261 = vst.msk [vmem:[#allocation3 + $0x60] sm:$0xff] %vm247, 0.0
      %262 = vst.msk [vmem:[#allocation3 + $0x68] sm:$0x3] %vm249, 0.0
      %263 = vst.msk [vmem:[#allocation3 + $0x70] sm:$0xff] %vm247, 0.0
      %264 = vst.msk [vmem:[#allocation3 + $0x78] sm:$0x3] %vm249, 0.0
      %265 = vst.msk [vmem:[#allocation3 + $0x80] sm:$0xff] %vm247, 0.0
      %266 = vst.msk [vmem:[#allocation3 + $0x88] sm:$0x3] %vm249, 0.0
      %267 = vst.msk [vmem:[#allocation3 + $0x90] sm:$0xff] %vm247, 0.0
      %268 = vst.msk [vmem:[#allocation3 + $0x98] sm:$0x3] %vm249, 0.0
      %v269 = vld [vmem:[%s219] ss:$2 sm:$0xff]
      %s270 = scalar_lea.vmem %s219, 16
      %v271 = vld [vmem:[%s270] ss:$2 sm:$0xff]
      %s272 = scalar_lea.vmem %s219, 32
      %v273 = vld [vmem:[%s272] ss:$2 sm:$0xff]
      %s274 = scalar_lea.vmem %s219, 48
      %v275 = vld [vmem:[%s274] ss:$2 sm:$0xff]
      %s276 = scalar_lea.vmem %s219, 64
      %v277 = vld [vmem:[%s276] ss:$2 sm:$0xff]
      %s278 = scalar_lea.vmem %s219, 80
      %v279 = vld [vmem:[%s278] ss:$2 sm:$0xff]
      %s280 = scalar_lea.vmem %s219, 96
      %v281 = vld [vmem:[%s280] ss:$2 sm:$0xff]
      %s282 = scalar_lea.vmem %s219, 112
      %v283 = vld [vmem:[%s282] ss:$2 sm:$0xff]
      %s284 = scalar_lea.vmem %s219, 128
      %v285 = vld [vmem:[%s284] ss:$2 sm:$0xff]
      %s286 = scalar_lea.vmem %s219, 144
      %v287 = vld [vmem:[%s286] ss:$2 sm:$0xff]
      %s288 = scalar_lea.vmem %s219, 160
      %v289 = vld [vmem:[%s288] ss:$2 sm:$0xff]
      %s290 = scalar_lea.vmem %s219, 176
      %v291 = vld [vmem:[%s290] ss:$2 sm:$0xff]
      %s292 = scalar_lea.vmem %s219, 192
      %v293 = vld [vmem:[%s292] ss:$2 sm:$0xff]
      %s294 = scalar_lea.vmem %s219, 208
      %v295 = vld [vmem:[%s294] ss:$2 sm:$0xff]
      %s296 = scalar_lea.vmem %s219, 224
      %v297 = vld [vmem:[%s296] ss:$2 sm:$0xff]
      %s298 = scalar_lea.vmem %s219, 240
      %v299 = vld [vmem:[%s298] ss:$2 sm:$0xff]
      %s300 = scalar_lea.vmem %s219, 1
      %v301 = vld [vmem:[%s300] ss:$2 sm:$0xff]
      %s302 = scalar_lea.vmem %s219, 17
      %v303 = vld [vmem:[%s302] ss:$2 sm:$0xff]
      %s304 = scalar_lea.vmem %s219, 33
      %v305 = vld [vmem:[%s304] ss:$2 sm:$0xff]
      %s306 = scalar_lea.vmem %s219, 49
      %v307 = vld [vmem:[%s306] ss:$2 sm:$0xff]
      %s308 = scalar_lea.vmem %s219, 65
      %v309 = vld [vmem:[%s308] ss:$2 sm:$0xff]
      %s310 = scalar_lea.vmem %s219, 81
      %v311 = vld [vmem:[%s310] ss:$2 sm:$0xff]
      %s312 = scalar_lea.vmem %s219, 97
      %v313 = vld [vmem:[%s312] ss:$2 sm:$0xff]
      %s314 = scalar_lea.vmem %s219, 113
      %v315 = vld [vmem:[%s314] ss:$2 sm:$0xff]
      %s316 = scalar_lea.vmem %s219, 129
      %v317 = vld [vmem:[%s316] ss:$2 sm:$0xff]
      %s318 = scalar_lea.vmem %s219, 145
      %v319 = vld [vmem:[%s318] ss:$2 sm:$0xff]
      %s320 = scalar_lea.vmem %s219, 161
      %v321 = vld [vmem:[%s320] ss:$2 sm:$0xff]
      %s322 = scalar_lea.vmem %s219, 177
      %v323 = vld [vmem:[%s322] ss:$2 sm:$0xff]
      %s324 = scalar_lea.vmem %s219, 193
      %v325 = vld [vmem:[%s324] ss:$2 sm:$0xff]
      %s326 = scalar_lea.vmem %s219, 209
      %v327 = vld [vmem:[%s326] ss:$2 sm:$0xff]
      %s328 = scalar_lea.vmem %s219, 225
      %v329 = vld [vmem:[%s328] ss:$2 sm:$0xff]
      %s330 = scalar_lea.vmem %s219, 241
      %v331 = vld [vmem:[%s330] ss:$2 sm:$0xff]
      %v332 = vmax.f32 %v269, %v301
      %v333 = vmax.f32 %v271, %v303
      %v334 = vmax.f32 %v273, %v305
      %v335 = vmax.f32 %v275, %v307
      %v336 = vmax.f32 %v277, %v309
      %v337 = vmax.f32 %v279, %v311
      %v338 = vmax.f32 %v281, %v313
      %v339 = vmax.f32 %v283, %v315
      %v340 = vmax.f32 %v285, %v317
      %v341 = vmax.f32 %v287, %v319
      %v342 = vmax.f32 %v289, %v321
      %v343 = vmax.f32 %v291, %v323
      %v344 = vmax.f32 %v293, %v325
      %v345 = vmax.f32 %v295, %v327
      %v346 = vmax.f32 %v297, %v329
      %v347 = vmax.f32 %v299, %v331
      %v348 = vsel %vm225, %v332, -inf
      %v349 = vsel %vm225, %v333, -inf
      %v350 = vmax.f32 %v348, %v349
      %v351 = vsel %vm225, %v334, -inf
      %v352 = vsel %vm225, %v335, -inf
      %v353 = vmax.f32 %v351, %v352
      %v354 = vsel %vm225, %v336, -inf
      %v355 = vsel %vm225, %v337, -inf
      %v356 = vmax.f32 %v354, %v355
      %v357 = vsel %vm225, %v338, -inf
      %v358 = vsel %vm225, %v339, -inf
      %v359 = vmax.f32 %v357, %v358
      %v360 = vsel %vm225, %v340, -inf
      %v361 = vsel %vm225, %v341, -inf
      %v362 = vmax.f32 %v360, %v361
      %v363 = vsel %vm225, %v342, -inf
      %v364 = vsel %vm225, %v343, -inf
      %v365 = vmax.f32 %v363, %v364
      %v366 = vsel %vm225, %v344, -inf
      %v367 = vsel %vm225, %v345, -inf
      %v368 = vmax.f32 %v366, %v367
      %v369 = vsel %vm225, %v346, -inf
      %v370 = vsel %vm225, %v347, -inf
      %v371 = vmax.f32 %v369, %v370
      %s372 = scalar_lea.vmem [#allocation2], 16
      %373 = vst.msk [vmem:[%s372 + $0x1] sm:$0xff] %vm225, %v350
      %374 = vst.msk [vmem:[%s372 + $0x11] sm:$0xff] %vm225, %v353
      %375 = vst.msk [vmem:[%s372 + $0x21] sm:$0xff] %vm225, %v356
      %376 = vst.msk [vmem:[%s372 + $0x31] sm:$0xff] %vm225, %v359
      %377 = vst.msk [vmem:[%s372 + $0x41] sm:$0xff] %vm225, %v362
      %378 = vst.msk [vmem:[%s372 + $0x51] sm:$0xff] %vm225, %v365
      %379 = vst.msk [vmem:[%s372 + $0x61] sm:$0xff] %vm225, %v368
      %380 = vst.msk [vmem:[%s372 + $0x71] sm:$0xff] %vm225, %v371
      %v381 = vld [vmem:[#allocation2] sm:$0xff]
      %v382 = vld [vmem:[#allocation2 + $0x10] sm:$0xff]
      %v383 = vld [vmem:[#allocation2 + $0x20] sm:$0xff]
      %v384 = vld [vmem:[#allocation2 + $0x30] sm:$0xff]
      %v385 = vld [vmem:[#allocation2 + $0x40] sm:$0xff]
      %v386 = vld [vmem:[#allocation2 + $0x50] sm:$0xff]
      %v387 = vld [vmem:[#allocation2 + $0x60] sm:$0xff]
      %v388 = vld [vmem:[#allocation2 + $0x70] sm:$0xff]
      %v389 = vld [vmem:[#allocation2 + $0x1] sm:$0xff]
      %v390 = vld [vmem:[#allocation2 + $0x11] sm:$0xff]
      %v391 = vld [vmem:[#allocation2 + $0x21] sm:$0xff]
      %v392 = vld [vmem:[#allocation2 + $0x31] sm:$0xff]
      %v393 = vld [vmem:[#allocation2 + $0x41] sm:$0xff]
      %v394 = vld [vmem:[#allocation2 + $0x51] sm:$0xff]
      %v395 = vld [vmem:[#allocation2 + $0x61] sm:$0xff]
      %v396 = vld [vmem:[#allocation2 + $0x71] sm:$0xff]
      %v397 = vld [vmem:[#allocation2 + $0x2] sm:$0xff]
      %v398 = vld [vmem:[#allocation2 + $0x12] sm:$0xff]
      %v399 = vld [vmem:[#allocation2 + $0x22] sm:$0xff]
      %v400 = vld [vmem:[#allocation2 + $0x32] sm:$0xff]
      %v401 = vld [vmem:[#allocation2 + $0x42] sm:$0xff]
      %v402 = vld [vmem:[#allocation2 + $0x52] sm:$0xff]
      %v403 = vld [vmem:[#allocation2 + $0x62] sm:$0xff]
      %v404 = vld [vmem:[#allocation2 + $0x72] sm:$0xff]
      %v405 = vld [vmem:[%s372] sm:$0xff]
      %v406 = vld [vmem:[%s372 + $0x10] sm:$0xff]
      %v407 = vld [vmem:[%s372 + $0x20] sm:$0xff]
      %v408 = vld [vmem:[%s372 + $0x30] sm:$0xff]
      %v409 = vld [vmem:[%s372 + $0x40] sm:$0xff]
      %v410 = vld [vmem:[%s372 + $0x50] sm:$0xff]
      %v411 = vld [vmem:[%s372 + $0x60] sm:$0xff]
      %v412 = vld [vmem:[%s372 + $0x70] sm:$0xff]
      %v413 = vld [vmem:[%s372 + $0x1] sm:$0xff]
      %v414 = vld [vmem:[%s372 + $0x11] sm:$0xff]
      %v415 = vld [vmem:[%s372 + $0x21] sm:$0xff]
      %v416 = vld [vmem:[%s372 + $0x31] sm:$0xff]
      %v417 = vld [vmem:[%s372 + $0x41] sm:$0xff]
      %v418 = vld [vmem:[%s372 + $0x51] sm:$0xff]
      %v419 = vld [vmem:[%s372 + $0x61] sm:$0xff]
      %v420 = vld [vmem:[%s372 + $0x71] sm:$0xff]
      %v421 = vld [vmem:[%s372 + $0x2] sm:$0xff]
      %v422 = vld [vmem:[%s372 + $0x12] sm:$0xff]
      %v423 = vld [vmem:[%s372 + $0x22] sm:$0xff]
      %v424 = vld [vmem:[%s372 + $0x32] sm:$0xff]
      %v425 = vld [vmem:[%s372 + $0x42] sm:$0xff]
      %v426 = vld [vmem:[%s372 + $0x52] sm:$0xff]
      %v427 = vld [vmem:[%s372 + $0x62] sm:$0xff]
      %v428 = vld [vmem:[%s372 + $0x72] sm:$0xff]
      %s429 = scalar_lea.vmem [#allocation2], 32
      %v430 = vld [vmem:[%s429] sm:$0xff]
      %v431 = vld [vmem:[%s429 + $0x10] sm:$0xff]
      %v432 = vld [vmem:[%s429 + $0x20] sm:$0xff]
      %v433 = vld [vmem:[%s429 + $0x30] sm:$0xff]
      %v434 = vld [vmem:[%s429 + $0x40] sm:$0xff]
      %v435 = vld [vmem:[%s429 + $0x50] sm:$0xff]
      %v436 = vld [vmem:[%s429 + $0x60] sm:$0xff]
      %v437 = vld [vmem:[%s429 + $0x70] sm:$0xff]
      %v438 = vld [vmem:[%s429 + $0x1] sm:$0xff]
      %v439 = vld [vmem:[%s429 + $0x11] sm:$0xff]
      %v440 = vld [vmem:[%s429 + $0x21] sm:$0xff]
      %v441 = vld [vmem:[%s429 + $0x31] sm:$0xff]
      %v442 = vld [vmem:[%s429 + $0x41] sm:$0xff]
      %v443 = vld [vmem:[%s429 + $0x51] sm:$0xff]
      %v444 = vld [vmem:[%s429 + $0x61] sm:$0xff]
      %v445 = vld [vmem:[%s429 + $0x71] sm:$0xff]
      %v446 = vld [vmem:[%s429 + $0x2] sm:$0xff]
      %v447 = vld [vmem:[%s429 + $0x12] sm:$0xff]
      %v448 = vld [vmem:[%s429 + $0x22] sm:$0xff]
      %v449 = vld [vmem:[%s429 + $0x32] sm:$0xff]
      %v450 = vld [vmem:[%s429 + $0x42] sm:$0xff]
      %v451 = vld [vmem:[%s429 + $0x52] sm:$0xff]
      %v452 = vld [vmem:[%s429 + $0x62] sm:$0xff]
      %v453 = vld [vmem:[%s429 + $0x72] sm:$0xff]
      %462 = vrot.lane.b32.xlu0 %v389, 4
      %v463 = vpop.permute.xlu0 %462
      %464 = vrot.lane.b32.xlu0 %v390, 4
      %v465 = vpop.permute.xlu0 %464
      %466 = vrot.lane.b32.xlu0 %v391, 4
      %v467 = vpop.permute.xlu0 %466
      %468 = vrot.lane.b32.xlu0 %v392, 4
      %v469 = vpop.permute.xlu0 %468
      %470 = vrot.lane.b32.xlu0 %v393, 4
      %v471 = vpop.permute.xlu0 %470
      %472 = vrot.lane.b32.xlu0 %v394, 4
      %v473 = vpop.permute.xlu0 %472
      %474 = vrot.lane.b32.xlu0 %v395, 4
      %v475 = vpop.permute.xlu0 %474
      %476 = vrot.lane.b32.xlu0 %v396, 4
      %v477 = vpop.permute.xlu0 %476
      %494 = vrot.lane.b32.xlu0 %v397, 8
      %v495 = vpop.permute.xlu0 %494
      %496 = vrot.lane.b32.xlu0 %v398, 8
      %v497 = vpop.permute.xlu0 %496
      %498 = vrot.lane.b32.xlu0 %v399, 8
      %v499 = vpop.permute.xlu0 %498
      %500 = vrot.lane.b32.xlu0 %v400, 8
      %v501 = vpop.permute.xlu0 %500
      %502 = vrot.lane.b32.xlu0 %v401, 8
      %v503 = vpop.permute.xlu0 %502
      %504 = vrot.lane.b32.xlu0 %v402, 8
      %v505 = vpop.permute.xlu0 %504
      %506 = vrot.lane.b32.xlu0 %v403, 8
      %v507 = vpop.permute.xlu0 %506
      %508 = vrot.lane.b32.xlu0 %v404, 8
      %v509 = vpop.permute.xlu0 %508
      %526 = vrot.lane.b32.xlu0 %v405, 12
      %v527 = vpop.permute.xlu0 %526
      %528 = vrot.lane.b32.xlu0 %v406, 12
      %v529 = vpop.permute.xlu0 %528
      %530 = vrot.lane.b32.xlu0 %v407, 12
      %v531 = vpop.permute.xlu0 %530
      %532 = vrot.lane.b32.xlu0 %v408, 12
      %v533 = vpop.permute.xlu0 %532
      %534 = vrot.lane.b32.xlu0 %v409, 12
      %v535 = vpop.permute.xlu0 %534
      %536 = vrot.lane.b32.xlu0 %v410, 12
      %v537 = vpop.permute.xlu0 %536
      %538 = vrot.lane.b32.xlu0 %v411, 12
      %v539 = vpop.permute.xlu0 %538
      %540 = vrot.lane.b32.xlu0 %v412, 12
      %v541 = vpop.permute.xlu0 %540
      %558 = vrot.lane.b32.xlu0 %v413, 16
      %v559 = vpop.permute.xlu0 %558
      %560 = vrot.lane.b32.xlu0 %v414, 16
      %v561 = vpop.permute.xlu0 %560
      %562 = vrot.lane.b32.xlu0 %v415, 16
      %v563 = vpop.permute.xlu0 %562
      %564 = vrot.lane.b32.xlu0 %v416, 16
      %v565 = vpop.permute.xlu0 %564
      %566 = vrot.lane.b32.xlu0 %v417, 16
      %v567 = vpop.permute.xlu0 %566
      %568 = vrot.lane.b32.xlu0 %v418, 16
      %v569 = vpop.permute.xlu0 %568
      %570 = vrot.lane.b32.xlu0 %v419, 16
      %v571 = vpop.permute.xlu0 %570
      %572 = vrot.lane.b32.xlu0 %v420, 16
      %v573 = vpop.permute.xlu0 %572
      %590 = vrot.lane.b32.xlu0 %v421, 20
      %v591 = vpop.permute.xlu0 %590
      %592 = vrot.lane.b32.xlu0 %v422, 20
      %v593 = vpop.permute.xlu0 %592
      %594 = vrot.lane.b32.xlu0 %v423, 20
      %v595 = vpop.permute.xlu0 %594
      %596 = vrot.lane.b32.xlu0 %v424, 20
      %v597 = vpop.permute.xlu0 %596
      %598 = vrot.lane.b32.xlu0 %v425, 20
      %v599 = vpop.permute.xlu0 %598
      %600 = vrot.lane.b32.xlu0 %v426, 20
      %v601 = vpop.permute.xlu0 %600
      %602 = vrot.lane.b32.xlu0 %v427, 20
      %v603 = vpop.permute.xlu0 %602
      %604 = vrot.lane.b32.xlu0 %v428, 20
      %v605 = vpop.permute.xlu0 %604
      %622 = vrot.lane.b32.xlu0 %v430, 24
      %v623 = vpop.permute.xlu0 %622
      %624 = vrot.lane.b32.xlu0 %v431, 24
      %v625 = vpop.permute.xlu0 %624
      %626 = vrot.lane.b32.xlu0 %v432, 24
      %v627 = vpop.permute.xlu0 %626
      %628 = vrot.lane.b32.xlu0 %v433, 24
      %v629 = vpop.permute.xlu0 %628
      %630 = vrot.lane.b32.xlu0 %v434, 24
      %v631 = vpop.permute.xlu0 %630
      %632 = vrot.lane.b32.xlu0 %v435, 24
      %v633 = vpop.permute.xlu0 %632
      %634 = vrot.lane.b32.xlu0 %v436, 24
      %v635 = vpop.permute.xlu0 %634
      %636 = vrot.lane.b32.xlu0 %v437, 24
      %v637 = vpop.permute.xlu0 %636
      %654 = vrot.lane.b32.xlu0 %v438, 28
      %v655 = vpop.permute.xlu0 %654
      %656 = vrot.lane.b32.xlu0 %v439, 28
      %v657 = vpop.permute.xlu0 %656
      %658 = vrot.lane.b32.xlu0 %v440, 28
      %v659 = vpop.permute.xlu0 %658
      %660 = vrot.lane.b32.xlu0 %v441, 28
      %v661 = vpop.permute.xlu0 %660
      %662 = vrot.lane.b32.xlu0 %v442, 28
      %v663 = vpop.permute.xlu0 %662
      %664 = vrot.lane.b32.xlu0 %v443, 28
      %v665 = vpop.permute.xlu0 %664
      %666 = vrot.lane.b32.xlu0 %v444, 28
      %v667 = vpop.permute.xlu0 %666
      %668 = vrot.lane.b32.xlu0 %v445, 28
      %v669 = vpop.permute.xlu0 %668
      %686 = vrot.lane.b32.xlu0 %v446, 32
      %v687 = vpop.permute.xlu0 %686
      %688 = vrot.lane.b32.xlu0 %v447, 32
      %v689 = vpop.permute.xlu0 %688
      %690 = vrot.lane.b32.xlu0 %v448, 32
      %v691 = vpop.permute.xlu0 %690
      %692 = vrot.lane.b32.xlu0 %v449, 32
      %v693 = vpop.permute.xlu0 %692
      %694 = vrot.lane.b32.xlu0 %v450, 32
      %v695 = vpop.permute.xlu0 %694
      %696 = vrot.lane.b32.xlu0 %v451, 32
      %v697 = vpop.permute.xlu0 %696
      %698 = vrot.lane.b32.xlu0 %v452, 32
      %v699 = vpop.permute.xlu0 %698
      %700 = vrot.lane.b32.xlu0 %v453, 32
      %v701 = vpop.permute.xlu0 %700
      %v710 = vsel %vm225, %v381, %v463
      %v711 = vsel %vm225, %v382, %v465
      %v712 = vsel %vm225, %v383, %v467
      %v713 = vsel %vm225, %v384, %v469
      %v714 = vsel %vm225, %v385, %v471
      %v715 = vsel %vm225, %v386, %v473
      %v716 = vsel %vm225, %v387, %v475
      %v717 = vsel %vm225, %v388, %v477
      %v718 = vsel %vm247, %v710, %v495
      %v719 = vsel %vm247, %v711, %v497
      %v720 = vsel %vm247, %v712, %v499
      %v721 = vsel %vm247, %v713, %v501
      %v722 = vsel %vm247, %v714, %v503
      %v723 = vsel %vm247, %v715, %v505
      %v724 = vsel %vm247, %v716, %v507
      %v725 = vsel %vm247, %v717, %v509
      %vm726 = vcmask 97280
      %v727 = vsel %vm726, %v718, %v527
      %v728 = vsel %vm726, %v719, %v529
      %v729 = vsel %vm726, %v720, %v531
      %v730 = vsel %vm726, %v721, %v533
      %v731 = vsel %vm726, %v722, %v535
      %v732 = vsel %vm726, %v723, %v537
      %v733 = vsel %vm726, %v724, %v539
      %v734 = vsel %vm726, %v725, %v541
      %vm735 = vcmask 130048
      %v736 = vsel %vm735, %v727, %v559
      %v737 = vsel %vm735, %v728, %v561
      %v738 = vsel %vm735, %v729, %v563
      %v739 = vsel %vm735, %v730, %v565
      %v740 = vsel %vm735, %v731, %v567
      %v741 = vsel %vm735, %v732, %v569
      %v742 = vsel %vm735, %v733, %v571
      %v743 = vsel %vm735, %v734, %v573
      %vm744 = vcmask 162816
      %v745 = vsel %vm744, %v736, %v591
      %v746 = vsel %vm744, %v737, %v593
      %v747 = vsel %vm744, %v738, %v595
      %v748 = vsel %vm744, %v739, %v597
      %v749 = vsel %vm744, %v740, %v599
      %v750 = vsel %vm744, %v741, %v601
      %v751 = vsel %vm744, %v742, %v603
      %v752 = vsel %vm744, %v743, %v605
      %vm753 = vcmask 195584
      %v754 = vsel %vm753, %v745, %v623
      %v755 = vsel %vm753, %v746, %v625
      %v756 = vsel %vm753, %v747, %v627
      %v757 = vsel %vm753, %v748, %v629
      %v758 = vsel %vm753, %v749, %v631
      %v759 = vsel %vm753, %v750, %v633
      %v760 = vsel %vm753, %v751, %v635
      %v761 = vsel %vm753, %v752, %v637
      %vm762 = vcmask 228352
      %v763 = vsel %vm762, %v754, %v655
      %v764 = vsel %vm762, %v755, %v657
      %v765 = vsel %vm762, %v756, %v659
      %v766 = vsel %vm762, %v757, %v661
      %v767 = vsel %vm762, %v758, %v663
      %v768 = vsel %vm762, %v759, %v665
      %v769 = vsel %vm762, %v760, %v667
      %v770 = vsel %vm762, %v761, %v669
      %vm771 = vcmask 261120
      %v772 = vsel %vm771, %v763, %v687
      %v773 = vsel %vm771, %v764, %v689
      %v774 = vsel %vm771, %v765, %v691
      %v775 = vsel %vm771, %v766, %v693
      %v776 = vsel %vm771, %v767, %v695
      %v777 = vsel %vm771, %v768, %v697
      %v778 = vsel %vm771, %v769, %v699
      %v779 = vsel %vm771, %v770, %v701
      %v780 = vld [vmem:[%s1] sm:$0xff]
      %v781 = vld [vmem:[%s1 + $0x8] sm:$0xff]
      %v782 = vld [vmem:[%s1 + $0x10] sm:$0xff]
      %v783 = vld [vmem:[%s1 + $0x18] sm:$0xff]
      %v784 = vld [vmem:[%s1 + $0x20] sm:$0xf]
      %v785 = vld [vmem:[%s2] sm:$0x1]
      %v787 = vlaneseq
      %v788 = vshrl.u32 %v787, 7
      %v789 = vsub.s32 0, %v788
      %v790 = vrot.slane %v785, %v789
      %vm792 = vcmask 293888
      %v794 = vsel %vm792, %v772, 0
      %v797 = vsel %vm792, %v773, 0
      %v800 = vsel %vm792, %v774, 0
      %v803 = vsel %vm792, %v775, 0
      %v806 = vsel %vm792, %v776, 0
      %v809 = vsel %vm792, %v777, 0
      %v812 = vsel %vm792, %v778, 0
      %v815 = vsel %vm792, %v779, 0
      %vm817 = vcmask 1043456
      %v819 = vsel %vm817, %v784, 0
      %821 = vmatprep.subr.mxu0 0.0
      %822 = vmatpush1.msra.mxu0 %v780
      %823 = vmatprep.subr.mxu0 0.0
      %824 = vmatpush1.msra.mxu0 %v781
      %825 = vmatprep.subr.mxu0 0.0
      %826 = vmatpush1.msra.mxu0 %v782
      %827 = vmatprep.subr.mxu0 0.0
      %828 = vmatpush1.msra.mxu0 %v783
      %829 = vmatprep.subr.mxu0 0.0
      %830 = vmatpush1.msra.mxu0 %v819
      %831 = vmatprep.subr.mxu0 0.0
      %832 = vmatpush1.msra.mxu0 0.0
      %833 = vmatprep.subr.mxu0 0.0
      %834 = vmatpush1.msra.mxu0 0.0
      %835 = vmatprep.subr.mxu0 0.0
      %836 = vmatpush1.msra.mxu0 0.0
      %837 = vmatprep.subr.mxu0 0.0
      %838 = vmatpush1.msra.mxu0 0.0
      %839 = vmatprep.subr.mxu0 0.0
      %840 = vmatpush1.msra.mxu0 0.0
      %841 = vmatprep.subr.mxu0 0.0
      %842 = vmatpush1.msra.mxu0 0.0
      %843 = vmatprep.subr.mxu0 0.0
      %844 = vmatpush1.msra.mxu0 0.0
      %845 = vmatprep.subr.mxu0 0.0
      %846 = vmatpush1.msra.mxu0 0.0
      %847 = vmatprep.subr.mxu0 0.0
      %848 = vmatpush1.msra.mxu0 0.0
      %849 = vmatprep.subr.mxu0 0.0
      %850 = vmatpush1.msra.mxu0 0.0
      %851 = vmatprep.subr.mxu0 0.0
      %852 = vmatpush1.msra.mxu0 0.0
      %853 = vmatprep.subr.mxu0 0.0
      %854 = vmatpush1.msra.mxu0 0.0
      %855 = vmatprep.subr.mxu0 0.0
      %856 = vmatpush1.msra.mxu0 0.0
      %857 = vmatprep.subr.mxu0 0.0
      %858 = vmatpush1.msra.mxu0 0.0
      %859 = vmatprep.subr.mxu0 0.0
      %860 = vmatpush1.msra.mxu0 0.0
      %861 = vmatprep.subr.mxu0 0.0
      %862 = vmatpush1.msra.mxu0 0.0
      %863 = vmatprep.subr.mxu0 0.0
      %864 = vmatpush1.msra.mxu0 0.0
      %865 = vmatprep.subr.mxu0 0.0
      %866 = vmatpush1.msra.mxu0 0.0
      %867 = vmatprep.subr.mxu0 0.0
      %868 = vmatpush1.msra.mxu0 0.0
      %869 = vmatprep.subr.mxu0 0.0
      %870 = vmatpush1.msra.mxu0 0.0
      %871 = vmatprep.subr.mxu0 0.0
      %872 = vmatpush1.msra.mxu0 0.0
      %873 = vmatprep.subr.mxu0 0.0
      %874 = vmatpush1.msra.mxu0 0.0
      %875 = vmatprep.subr.mxu0 0.0
      %876 = vmatpush1.msra.mxu0 0.0
      %877 = vmatprep.subr.mxu0 0.0
      %878 = vmatpush1.msra.mxu0 0.0
      %879 = vmatprep.subr.mxu0 0.0
      %880 = vmatpush1.msra.mxu0 0.0
      %881 = vmatprep.subr.mxu0 0.0
      %882 = vmatpush1.msra.mxu0 0.0
      %883 = vmatprep.subr.mxu0 0.0
      %884 = vmatpush1.msra.mxu0 0.0
      %885 = vmatprep.mubr.f32.mxu0 0.0
      %886 = vmatmul.mubr.f32.gmra.mrb[0].mxu0 %v794
      %v887 = vpop.f32.mrb[0].mxu0
      %v888 = vadd.f32 %v790, %v887
      %v889 = vpop.f32.mrb[0].mxu0
      %890 = vmatprep.mubr.f32.mxu0 0.0
      %891 = vmatmul.mubr.f32.gmra.mrb[0].mxu0 %v797
      %v892 = vpop.f32.mrb[0].mxu0
      %v893 = vadd.f32 %v790, %v892
      %v894 = vpop.f32.mrb[0].mxu0
      %895 = vmatprep.mubr.f32.mxu0 0.0
      %896 = vmatmul.mubr.f32.gmra.mrb[0].mxu0 %v800
      %v897 = vpop.f32.mrb[0].mxu0
      %v898 = vadd.f32 %v790, %v897
      %v899 = vpop.f32.mrb[0].mxu0
      %900 = vmatprep.mubr.f32.mxu0 0.0
      %901 = vmatmul.mubr.f32.gmra.mrb[0].mxu0 %v803
      %v902 = vpop.f32.mrb[0].mxu0
      %v903 = vadd.f32 %v790, %v902
      %v904 = vpop.f32.mrb[0].mxu0
      %905 = vmatprep.mubr.f32.mxu0 0.0
      %906 = vmatmul.mubr.f32.gmra.mrb[0].mxu0 %v806
      %v907 = vpop.f32.mrb[0].mxu0
      %v908 = vadd.f32 %v790, %v907
      %v909 = vpop.f32.mrb[0].mxu0
      %910 = vmatprep.mubr.f32.mxu0 0.0
      %911 = vmatmul.mubr.f32.gmra.mrb[0].mxu0 %v809
      %v912 = vpop.f32.mrb[0].mxu0
      %v913 = vadd.f32 %v790, %v912
      %v914 = vpop.f32.mrb[0].mxu0
      %915 = vmatprep.mubr.f32.mxu0 0.0
      %916 = vmatmul.mubr.f32.gmra.mrb[0].mxu0 %v812
      %v917 = vpop.f32.mrb[0].mxu0
      %v918 = vadd.f32 %v790, %v917
      %v919 = vpop.f32.mrb[0].mxu0
      %920 = vmatprep.mubr.f32.mxu0 0.0
      %921 = vmatmul.mubr.f32.gmra.mrb[0].mxu0 %v815
      %v922 = vpop.f32.mrb[0].mxu0
      %v923 = vadd.f32 %v790, %v922
      %v924 = vpop.f32.mrb[0].mxu0
      %925 = vdwg.mxu0
      %v926 = vmax.f32 %v888, 0.0
      %v927 = vmax.f32 %v893, 0.0
      %v928 = vmax.f32 %v898, 0.0
      %v929 = vmax.f32 %v903, 0.0
      %v930 = vmax.f32 %v908, 0.0
      %v931 = vmax.f32 %v913, 0.0
      %v932 = vmax.f32 %v918, 0.0
      %v933 = vmax.f32 %v923, 0.0
      %s934 = scalar_lea.vmem [#allocation3], 16
      %935 = vst.msk [vmem:[%s934 + $0x1] sm:$0xff] %vm247, %v926
      %936 = vst.msk [vmem:[%s934 + $0x11] sm:$0xff] %vm247, %v927
      %937 = vst.msk [vmem:[%s934 + $0x21] sm:$0xff] %vm247, %v928
      %938 = vst.msk [vmem:[%s934 + $0x31] sm:$0xff] %vm247, %v929
      %939 = vst.msk [vmem:[%s934 + $0x41] sm:$0xff] %vm247, %v930
      %940 = vst.msk [vmem:[%s934 + $0x51] sm:$0xff] %vm247, %v931
      %941 = vst.msk [vmem:[%s934 + $0x61] sm:$0xff] %vm247, %v932
      %942 = vst.msk [vmem:[%s934 + $0x71] sm:$0xff] %vm247, %v933
      %v943 = vld [vmem:[#allocation3] sm:$0xff]
      %v944 = vld [vmem:[#allocation3 + $0x10] sm:$0xff]
      %v945 = vld [vmem:[#allocation3 + $0x20] sm:$0xff]
      %v946 = vld [vmem:[#allocation3 + $0x30] sm:$0xff]
      %v947 = vld [vmem:[#allocation3 + $0x40] sm:$0xff]
      %v948 = vld [vmem:[#allocation3 + $0x50] sm:$0xff]
      %v949 = vld [vmem:[#allocation3 + $0x60] sm:$0xff]
      %v950 = vld [vmem:[#allocation3 + $0x70] sm:$0xff]
      %v951 = vld [vmem:[#allocation3 + $0x1] sm:$0xff]
      %v952 = vld [vmem:[#allocation3 + $0x11] sm:$0xff]
      %v953 = vld [vmem:[#allocation3 + $0x21] sm:$0xff]
      %v954 = vld [vmem:[#allocation3 + $0x31] sm:$0xff]
      %v955 = vld [vmem:[#allocation3 + $0x41] sm:$0xff]
      %v956 = vld [vmem:[#allocation3 + $0x51] sm:$0xff]
      %v957 = vld [vmem:[#allocation3 + $0x61] sm:$0xff]
      %v958 = vld [vmem:[#allocation3 + $0x71] sm:$0xff]
      %v959 = vld [vmem:[#allocation3 + $0x2] sm:$0xff]
      %v960 = vld [vmem:[#allocation3 + $0x12] sm:$0xff]
      %v961 = vld [vmem:[#allocation3 + $0x22] sm:$0xff]
      %v962 = vld [vmem:[#allocation3 + $0x32] sm:$0xff]
      %v963 = vld [vmem:[#allocation3 + $0x42] sm:$0xff]
      %v964 = vld [vmem:[#allocation3 + $0x52] sm:$0xff]
      %v965 = vld [vmem:[#allocation3 + $0x62] sm:$0xff]
      %v966 = vld [vmem:[#allocation3 + $0x72] sm:$0xff]
      %v967 = vld [vmem:[%s934] sm:$0xff]
      %v968 = vld [vmem:[%s934 + $0x10] sm:$0xff]
      %v969 = vld [vmem:[%s934 + $0x20] sm:$0xff]
      %v970 = vld [vmem:[%s934 + $0x30] sm:$0xff]
      %v971 = vld [vmem:[%s934 + $0x40] sm:$0xff]
      %v972 = vld [vmem:[%s934 + $0x50] sm:$0xff]
      %v973 = vld [vmem:[%s934 + $0x60] sm:$0xff]
      %v974 = vld [vmem:[%s934 + $0x70] sm:$0xff]
      %v975 = vld [vmem:[%s934 + $0x1] sm:$0xff]
      %v976 = vld [vmem:[%s934 + $0x11] sm:$0xff]
      %v977 = vld [vmem:[%s934 + $0x21] sm:$0xff]
      %v978 = vld [vmem:[%s934 + $0x31] sm:$0xff]
      %v979 = vld [vmem:[%s934 + $0x41] sm:$0xff]
      %v980 = vld [vmem:[%s934 + $0x51] sm:$0xff]
      %v981 = vld [vmem:[%s934 + $0x61] sm:$0xff]
      %v982 = vld [vmem:[%s934 + $0x71] sm:$0xff]
      %v983 = vld [vmem:[%s934 + $0x2] sm:$0xff]
      %v984 = vld [vmem:[%s934 + $0x12] sm:$0xff]
      %v985 = vld [vmem:[%s934 + $0x22] sm:$0xff]
      %v986 = vld [vmem:[%s934 + $0x32] sm:$0xff]
      %v987 = vld [vmem:[%s934 + $0x42] sm:$0xff]
      %v988 = vld [vmem:[%s934 + $0x52] sm:$0xff]
      %v989 = vld [vmem:[%s934 + $0x62] sm:$0xff]
      %v990 = vld [vmem:[%s934 + $0x72] sm:$0xff]
      %s991 = scalar_lea.vmem [#allocation3], 32
      %v992 = vld [vmem:[%s991] sm:$0xff]
      %v993 = vld [vmem:[%s991 + $0x10] sm:$0xff]
      %v994 = vld [vmem:[%s991 + $0x20] sm:$0xff]
      %v995 = vld [vmem:[%s991 + $0x30] sm:$0xff]
      %v996 = vld [vmem:[%s991 + $0x40] sm:$0xff]
      %v997 = vld [vmem:[%s991 + $0x50] sm:$0xff]
      %v998 = vld [vmem:[%s991 + $0x60] sm:$0xff]
      %v999 = vld [vmem:[%s991 + $0x70] sm:$0xff]
      %v1000 = vld [vmem:[%s991 + $0x1] sm:$0xff]
      %v1001 = vld [vmem:[%s991 + $0x11] sm:$0xff]
      %v1002 = vld [vmem:[%s991 + $0x21] sm:$0xff]
      %v1003 = vld [vmem:[%s991 + $0x31] sm:$0xff]
      %v1004 = vld [vmem:[%s991 + $0x41] sm:$0xff]
      %v1005 = vld [vmem:[%s991 + $0x51] sm:$0xff]
      %v1006 = vld [vmem:[%s991 + $0x61] sm:$0xff]
      %v1007 = vld [vmem:[%s991 + $0x71] sm:$0xff]
      %v1008 = vld [vmem:[%s991 + $0x2] sm:$0xff]
      %v1009 = vld [vmem:[%s991 + $0x12] sm:$0xff]
      %v1010 = vld [vmem:[%s991 + $0x22] sm:$0xff]
      %v1011 = vld [vmem:[%s991 + $0x32] sm:$0xff]
      %v1012 = vld [vmem:[%s991 + $0x42] sm:$0xff]
      %v1013 = vld [vmem:[%s991 + $0x52] sm:$0xff]
      %v1014 = vld [vmem:[%s991 + $0x62] sm:$0xff]
      %v1015 = vld [vmem:[%s991 + $0x72] sm:$0xff]
      %1024 = vrot.lane.b32.xlu0 %v951, 8
      %v1025 = vpop.permute.xlu0 %1024
      %1026 = vrot.lane.b32.xlu0 %v952, 8
      %v1027 = vpop.permute.xlu0 %1026
      %1028 = vrot.lane.b32.xlu0 %v953, 8
      %v1029 = vpop.permute.xlu0 %1028
      %1030 = vrot.lane.b32.xlu0 %v954, 8
      %v1031 = vpop.permute.xlu0 %1030
      %1032 = vrot.lane.b32.xlu0 %v955, 8
      %v1033 = vpop.permute.xlu0 %1032
      %1034 = vrot.lane.b32.xlu0 %v956, 8
      %v1035 = vpop.permute.xlu0 %1034
      %1036 = vrot.lane.b32.xlu0 %v957, 8
      %v1037 = vpop.permute.xlu0 %1036
      %1038 = vrot.lane.b32.xlu0 %v958, 8
      %v1039 = vpop.permute.xlu0 %1038
      %1056 = vrot.lane.b32.xlu0 %v959, 16
      %v1057 = vpop.permute.xlu0 %1056
      %1058 = vrot.lane.b32.xlu0 %v960, 16
      %v1059 = vpop.permute.xlu0 %1058
      %1060 = vrot.lane.b32.xlu0 %v961, 16
      %v1061 = vpop.permute.xlu0 %1060
      %1062 = vrot.lane.b32.xlu0 %v962, 16
      %v1063 = vpop.permute.xlu0 %1062
      %1064 = vrot.lane.b32.xlu0 %v963, 16
      %v1065 = vpop.permute.xlu0 %1064
      %1066 = vrot.lane.b32.xlu0 %v964, 16
      %v1067 = vpop.permute.xlu0 %1066
      %1068 = vrot.lane.b32.xlu0 %v965, 16
      %v1069 = vpop.permute.xlu0 %1068
      %1070 = vrot.lane.b32.xlu0 %v966, 16
      %v1071 = vpop.permute.xlu0 %1070
      %1088 = vrot.lane.b32.xlu0 %v967, 24
      %v1089 = vpop.permute.xlu0 %1088
      %1090 = vrot.lane.b32.xlu0 %v968, 24
      %v1091 = vpop.permute.xlu0 %1090
      %1092 = vrot.lane.b32.xlu0 %v969, 24
      %v1093 = vpop.permute.xlu0 %1092
      %1094 = vrot.lane.b32.xlu0 %v970, 24
      %v1095 = vpop.permute.xlu0 %1094
      %1096 = vrot.lane.b32.xlu0 %v971, 24
      %v1097 = vpop.permute.xlu0 %1096
      %1098 = vrot.lane.b32.xlu0 %v972, 24
      %v1099 = vpop.permute.xlu0 %1098
      %1100 = vrot.lane.b32.xlu0 %v973, 24
      %v1101 = vpop.permute.xlu0 %1100
      %1102 = vrot.lane.b32.xlu0 %v974, 24
      %v1103 = vpop.permute.xlu0 %1102
      %1120 = vrot.lane.b32.xlu0 %v975, 32
      %v1121 = vpop.permute.xlu0 %1120
      %1122 = vrot.lane.b32.xlu0 %v976, 32
      %v1123 = vpop.permute.xlu0 %1122
      %1124 = vrot.lane.b32.xlu0 %v977, 32
      %v1125 = vpop.permute.xlu0 %1124
      %1126 = vrot.lane.b32.xlu0 %v978, 32
      %v1127 = vpop.permute.xlu0 %1126
      %1128 = vrot.lane.b32.xlu0 %v979, 32
      %v1129 = vpop.permute.xlu0 %1128
      %1130 = vrot.lane.b32.xlu0 %v980, 32
      %v1131 = vpop.permute.xlu0 %1130
      %1132 = vrot.lane.b32.xlu0 %v981, 32
      %v1133 = vpop.permute.xlu0 %1132
      %1134 = vrot.lane.b32.xlu0 %v982, 32
      %v1135 = vpop.permute.xlu0 %1134
      %1152 = vrot.lane.b32.xlu0 %v983, 40
      %v1153 = vpop.permute.xlu0 %1152
      %1154 = vrot.lane.b32.xlu0 %v984, 40
      %v1155 = vpop.permute.xlu0 %1154
      %1156 = vrot.lane.b32.xlu0 %v985, 40
      %v1157 = vpop.permute.xlu0 %1156
      %1158 = vrot.lane.b32.xlu0 %v986, 40
      %v1159 = vpop.permute.xlu0 %1158
      %1160 = vrot.lane.b32.xlu0 %v987, 40
      %v1161 = vpop.permute.xlu0 %1160
      %1162 = vrot.lane.b32.xlu0 %v988, 40
      %v1163 = vpop.permute.xlu0 %1162
      %1164 = vrot.lane.b32.xlu0 %v989, 40
      %v1165 = vpop.permute.xlu0 %1164
      %1166 = vrot.lane.b32.xlu0 %v990, 40
      %v1167 = vpop.permute.xlu0 %1166
      %1184 = vrot.lane.b32.xlu0 %v992, 48
      %v1185 = vpop.permute.xlu0 %1184
      %1186 = vrot.lane.b32.xlu0 %v993, 48
      %v1187 = vpop.permute.xlu0 %1186
      %1188 = vrot.lane.b32.xlu0 %v994, 48
      %v1189 = vpop.permute.xlu0 %1188
      %1190 = vrot.lane.b32.xlu0 %v995, 48
      %v1191 = vpop.permute.xlu0 %1190
      %1192 = vrot.lane.b32.xlu0 %v996, 48
      %v1193 = vpop.permute.xlu0 %1192
      %1194 = vrot.lane.b32.xlu0 %v997, 48
      %v1195 = vpop.permute.xlu0 %1194
      %1196 = vrot.lane.b32.xlu0 %v998, 48
      %v1197 = vpop.permute.xlu0 %1196
      %1198 = vrot.lane.b32.xlu0 %v999, 48
      %v1199 = vpop.permute.xlu0 %1198
      %1216 = vrot.lane.b32.xlu0 %v1000, 56
      %v1217 = vpop.permute.xlu0 %1216
      %1218 = vrot.lane.b32.xlu0 %v1001, 56
      %v1219 = vpop.permute.xlu0 %1218
      %1220 = vrot.lane.b32.xlu0 %v1002, 56
      %v1221 = vpop.permute.xlu0 %1220
      %1222 = vrot.lane.b32.xlu0 %v1003, 56
      %v1223 = vpop.permute.xlu0 %1222
      %1224 = vrot.lane.b32.xlu0 %v1004, 56
      %v1225 = vpop.permute.xlu0 %1224
      %1226 = vrot.lane.b32.xlu0 %v1005, 56
      %v1227 = vpop.permute.xlu0 %1226
      %1228 = vrot.lane.b32.xlu0 %v1006, 56
      %v1229 = vpop.permute.xlu0 %1228
      %1230 = vrot.lane.b32.xlu0 %v1007, 56
      %v1231 = vpop.permute.xlu0 %1230
      %1248 = vrot.lane.b32.xlu0 %v1008, 64
      %v1249 = vpop.permute.xlu0 %1248
      %1250 = vrot.lane.b32.xlu0 %v1009, 64
      %v1251 = vpop.permute.xlu0 %1250
      %1252 = vrot.lane.b32.xlu0 %v1010, 64
      %v1253 = vpop.permute.xlu0 %1252
      %1254 = vrot.lane.b32.xlu0 %v1011, 64
      %v1255 = vpop.permute.xlu0 %1254
      %1256 = vrot.lane.b32.xlu0 %v1012, 64
      %v1257 = vpop.permute.xlu0 %1256
      %1258 = vrot.lane.b32.xlu0 %v1013, 64
      %v1259 = vpop.permute.xlu0 %1258
      %1260 = vrot.lane.b32.xlu0 %v1014, 64
      %v1261 = vpop.permute.xlu0 %1260
      %1262 = vrot.lane.b32.xlu0 %v1015, 64
      %v1263 = vpop.permute.xlu0 %1262
      %v1272 = vsel %vm247, %v943, %v1025
      %v1273 = vsel %vm247, %v944, %v1027
      %v1274 = vsel %vm247, %v945, %v1029
      %v1275 = vsel %vm247, %v946, %v1031
      %v1276 = vsel %vm247, %v947, %v1033
      %v1277 = vsel %vm247, %v948, %v1035
      %v1278 = vsel %vm247, %v949, %v1037
      %v1279 = vsel %vm247, %v950, %v1039
      %v1280 = vsel %vm735, %v1272, %v1057
      %v1281 = vsel %vm735, %v1273, %v1059
      %v1282 = vsel %vm735, %v1274, %v1061
      %v1283 = vsel %vm735, %v1275, %v1063
      %v1284 = vsel %vm735, %v1276, %v1065
      %v1285 = vsel %vm735, %v1277, %v1067
      %v1286 = vsel %vm735, %v1278, %v1069
      %v1287 = vsel %vm735, %v1279, %v1071
      %v1288 = vsel %vm753, %v1280, %v1089
      %v1289 = vsel %vm753, %v1281, %v1091
      %v1290 = vsel %vm753, %v1282, %v1093
      %v1291 = vsel %vm753, %v1283, %v1095
      %v1292 = vsel %vm753, %v1284, %v1097
      %v1293 = vsel %vm753, %v1285, %v1099
      %v1294 = vsel %vm753, %v1286, %v1101
      %v1295 = vsel %vm753, %v1287, %v1103
      %v1296 = vsel %vm771, %v1288, %v1121
      %v1297 = vsel %vm771, %v1289, %v1123
      %v1298 = vsel %vm771, %v1290, %v1125
      %v1299 = vsel %vm771, %v1291, %v1127
      %v1300 = vsel %vm771, %v1292, %v1129
      %v1301 = vsel %vm771, %v1293, %v1131
      %v1302 = vsel %vm771, %v1294, %v1133
      %v1303 = vsel %vm771, %v1295, %v1135
      %vm1304 = vcmask 326656
      %v1305 = vsel %vm1304, %v1296, %v1153
      %v1306 = vsel %vm1304, %v1297, %v1155
      %v1307 = vsel %vm1304, %v1298, %v1157
      %v1308 = vsel %vm1304, %v1299, %v1159
      %v1309 = vsel %vm1304, %v1300, %v1161
      %v1310 = vsel %vm1304, %v1301, %v1163
      %v1311 = vsel %vm1304, %v1302, %v1165
      %v1312 = vsel %vm1304, %v1303, %v1167
      %vm1313 = vcmask 392192
      %v1314 = vsel %vm1313, %v1305, %v1185
      %v1315 = vsel %vm1313, %v1306, %v1187
      %v1316 = vsel %vm1313, %v1307, %v1189
      %v1317 = vsel %vm1313, %v1308, %v1191
      %v1318 = vsel %vm1313, %v1309, %v1193
      %v1319 = vsel %vm1313, %v1310, %v1195
      %v1320 = vsel %vm1313, %v1311, %v1197
      %v1321 = vsel %vm1313, %v1312, %v1199
      %vm1322 = vcmask 457728
      %v1323 = vsel %vm1322, %v1314, %v1217
      %v1324 = vsel %vm1322, %v1315, %v1219
      %v1325 = vsel %vm1322, %v1316, %v1221
      %v1326 = vsel %vm1322, %v1317, %v1223
      %v1327 = vsel %vm1322, %v1318, %v1225
      %v1328 = vsel %vm1322, %v1319, %v1227
      %v1329 = vsel %vm1322, %v1320, %v1229
      %v1330 = vsel %vm1322, %v1321, %v1231
      %vm1331 = vcmask 523264
      %v1332 = vsel %vm1331, %v1323, %v1249
      %v1333 = vsel %vm1331, %v1324, %v1251
      %v1334 = vsel %vm1331, %v1325, %v1253
      %v1335 = vsel %vm1331, %v1326, %v1255
      %v1336 = vsel %vm1331, %v1327, %v1257
      %v1337 = vsel %vm1331, %v1328, %v1259
      %v1338 = vsel %vm1331, %v1329, %v1261
      %v1339 = vsel %vm1331, %v1330, %v1263
      %v1340 = vld [vmem:[%s3] sm:$0xff]
      %v1341 = vld [vmem:[%s3 + $0x8] sm:$0xff]
      %v1342 = vld [vmem:[%s3 + $0x10] sm:$0xff]
      %v1343 = vld [vmem:[%s3 + $0x18] sm:$0xff]
      %v1344 = vld [vmem:[%s3 + $0x20] sm:$0xff]
      %v1345 = vld [vmem:[%s3 + $0x28] sm:$0xff]
      %v1346 = vld [vmem:[%s3 + $0x30] sm:$0xff]
      %v1347 = vld [vmem:[%s3 + $0x38] sm:$0xff]
      %v1348 = vld [vmem:[%s3 + $0x40] sm:$0xff]
      %v1349 = vld [vmem:[%s4] sm:$0x1]
      %v1351 = vlaneseq
      %v1352 = vshrl.u32 %v1351, 7
      %v1353 = vsub.s32 0, %v1352
      %v1354 = vrot.slane %v1349, %v1353
      %vm1356 = vcmask 588800
      %v1358 = vsel %vm1356, %v1332, 0
      %v1361 = vsel %vm1356, %v1333, 0
      %v1364 = vsel %vm1356, %v1334, 0
      %v1367 = vsel %vm1356, %v1335, 0
      %v1370 = vsel %vm1356, %v1336, 0
      %v1373 = vsel %vm1356, %v1337, 0
      %v1376 = vsel %vm1356, %v1338, 0
      %v1379 = vsel %vm1356, %v1339, 0
      %1381 = vmatprep.subr.mxu0 0.0
      %1382 = vmatpush1.msra.mxu0 %v1340
      %1383 = vmatprep.subr.mxu0 0.0
      %1384 = vmatpush1.msra.mxu0 %v1341
      %1385 = vmatprep.subr.mxu0 0.0
      %1386 = vmatpush1.msra.mxu0 %v1342
      %1387 = vmatprep.subr.mxu0 0.0
      %1388 = vmatpush1.msra.mxu0 %v1343
      %1389 = vmatprep.subr.mxu0 0.0
      %1390 = vmatpush1.msra.mxu0 %v1344
      %1391 = vmatprep.subr.mxu0 0.0
      %1392 = vmatpush1.msra.mxu0 %v1345
      %1393 = vmatprep.subr.mxu0 0.0
      %1394 = vmatpush1.msra.mxu0 %v1346
      %1395 = vmatprep.subr.mxu0 0.0
      %1396 = vmatpush1.msra.mxu0 %v1347
      %1397 = vmatprep.subr.mxu0 0.0
      %1398 = vmatpush1.msra.mxu0 %v1348
      %1399 = vmatprep.subr.mxu0 0.0
      %1400 = vmatpush1.msra.mxu0 0.0
      %1401 = vmatprep.subr.mxu0 0.0
      %1402 = vmatpush1.msra.mxu0 0.0
      %1403 = vmatprep.subr.mxu0 0.0
      %1404 = vmatpush1.msra.mxu0 0.0
      %1405 = vmatprep.subr.mxu0 0.0
      %1406 = vmatpush1.msra.mxu0 0.0
      %1407 = vmatprep.subr.mxu0 0.0
      %1408 = vmatpush1.msra.mxu0 0.0
      %1409 = vmatprep.subr.mxu0 0.0
      %1410 = vmatpush1.msra.mxu0 0.0
      %1411 = vmatprep.subr.mxu0 0.0
      %1412 = vmatpush1.msra.mxu0 0.0
      %1413 = vmatprep.subr.mxu0 0.0
      %1414 = vmatpush1.msra.mxu0 0.0
      %1415 = vmatprep.subr.mxu0 0.0
      %1416 = vmatpush1.msra.mxu0 0.0
      %1417 = vmatprep.subr.mxu0 0.0
      %1418 = vmatpush1.msra.mxu0 0.0
      %1419 = vmatprep.subr.mxu0 0.0
      %1420 = vmatpush1.msra.mxu0 0.0
      %1421 = vmatprep.subr.mxu0 0.0
      %1422 = vmatpush1.msra.mxu0 0.0
      %1423 = vmatprep.subr.mxu0 0.0
      %1424 = vmatpush1.msra.mxu0 0.0
      %1425 = vmatprep.subr.mxu0 0.0
      %1426 = vmatpush1.msra.mxu0 0.0
      %1427 = vmatprep.subr.mxu0 0.0
      %1428 = vmatpush1.msra.mxu0 0.0
      %1429 = vmatprep.subr.mxu0 0.0
      %1430 = vmatpush1.msra.mxu0 0.0
      %1431 = vmatprep.subr.mxu0 0.0
      %1432 = vmatpush1.msra.mxu0 0.0
      %1433 = vmatprep.subr.mxu0 0.0
      %1434 = vmatpush1.msra.mxu0 0.0
      %1435 = vmatprep.subr.mxu0 0.0
      %1436 = vmatpush1.msra.mxu0 0.0
      %1437 = vmatprep.subr.mxu0 0.0
      %1438 = vmatpush1.msra.mxu0 0.0
      %1439 = vmatprep.subr.mxu0 0.0
      %1440 = vmatpush1.msra.mxu0 0.0
      %1441 = vmatprep.subr.mxu0 0.0
      %1442 = vmatpush1.msra.mxu0 0.0
      %1443 = vmatprep.subr.mxu0 0.0
      %1444 = vmatpush1.msra.mxu0 0.0
      %1445 = vmatprep.mubr.f32.mxu0 0.0
      %1446 = vmatmul.mubr.f32.gmra.mrb[0].mxu0 %v1358
      %v1447 = vpop.f32.mrb[0].mxu0
      %v1448 = vadd.f32 %v1354, %v1447
      %v1449 = vpop.f32.mrb[0].mxu0
      %1450 = vmatprep.mubr.f32.mxu0 0.0
      %1451 = vmatmul.mubr.f32.gmra.mrb[0].mxu0 %v1361
      %v1452 = vpop.f32.mrb[0].mxu0
      %v1453 = vadd.f32 %v1354, %v1452
      %v1454 = vpop.f32.mrb[0].mxu0
      %1455 = vmatprep.mubr.f32.mxu0 0.0
      %1456 = vmatmul.mubr.f32.gmra.mrb[0].mxu0 %v1364
      %v1457 = vpop.f32.mrb[0].mxu0
      %v1458 = vadd.f32 %v1354, %v1457
      %v1459 = vpop.f32.mrb[0].mxu0
      %1460 = vmatprep.mubr.f32.mxu0 0.0
      %1461 = vmatmul.mubr.f32.gmra.mrb[0].mxu0 %v1367
      %v1462 = vpop.f32.mrb[0].mxu0
      %v1463 = vadd.f32 %v1354, %v1462
      %v1464 = vpop.f32.mrb[0].mxu0
      %1465 = vmatprep.mubr.f32.mxu0 0.0
      %1466 = vmatmul.mubr.f32.gmra.mrb[0].mxu0 %v1370
      %v1467 = vpop.f32.mrb[0].mxu0
      %v1468 = vadd.f32 %v1354, %v1467
      %v1469 = vpop.f32.mrb[0].mxu0
      %1470 = vmatprep.mubr.f32.mxu0 0.0
      %1471 = vmatmul.mubr.f32.gmra.mrb[0].mxu0 %v1373
      %v1472 = vpop.f32.mrb[0].mxu0
      %v1473 = vadd.f32 %v1354, %v1472
      %v1474 = vpop.f32.mrb[0].mxu0
      %1475 = vmatprep.mubr.f32.mxu0 0.0
      %1476 = vmatmul.mubr.f32.gmra.mrb[0].mxu0 %v1376
      %v1477 = vpop.f32.mrb[0].mxu0
      %v1478 = vadd.f32 %v1354, %v1477
      %v1479 = vpop.f32.mrb[0].mxu0
      %1480 = vmatprep.mubr.f32.mxu0 0.0
      %1481 = vmatmul.mubr.f32.gmra.mrb[0].mxu0 %v1379
      %v1482 = vpop.f32.mrb[0].mxu0
      %v1483 = vadd.f32 %v1354, %v1482
      %v1484 = vpop.f32.mrb[0].mxu0
      %1485 = vdwg.mxu0
      %v1486 = vmax.f32 %v1448, 0.0
      %v1487 = vmax.f32 %v1453, 0.0
      %v1488 = vmax.f32 %v1458, 0.0
      %v1489 = vmax.f32 %v1463, 0.0
      %v1490 = vmax.f32 %v1468, 0.0
      %v1491 = vmax.f32 %v1473, 0.0
      %v1492 = vmax.f32 %v1478, 0.0
      %v1493 = vmax.f32 %v1483, 0.0
      %1494 = vst [vmem:[%s224] sm:$0xff] %v1486
      %1495 = vst [vmem:[%s224 + $0x8] sm:$0xff] %v1487
      %1496 = vst [vmem:[%s224 + $0x10] sm:$0xff] %v1488
      %1497 = vst [vmem:[%s224 + $0x18] sm:$0xff] %v1489
      %1498 = vst [vmem:[%s224 + $0x20] sm:$0xff] %v1490
      %1499 = vst [vmem:[%s224 + $0x28] sm:$0xff] %v1491
      %1500 = vst [vmem:[%s224 + $0x30] sm:$0xff] %v1492
      %1501 = vst [vmem:[%s224 + $0x38] sm:$0xff] %v1493
      %p1502 = scmp.lt.s32.totalorder %s16, 1
      %s1503 = scalar_select %p1502, %s16, 1
      %s1504 = smul.addr %s1503, 8
      %s1505 = smul.addr %s1504, 8
      %s1506 = scalar_lea.vmem %s5, %s1505
      // Predicated region
      $region41: #{down_forward.1} parent=39 // pred_check
        %p1507 = pneg %p144
      $region42: #{down_forward.1} parent=39 // pred_check_branch
        %1509 = sbr.rel (%p1507) target = $region44
      $region43: #{down_forward.1} parent=39 // pred_region
        _
      $region44: #{down_forward.1} parent=39 // pred_fallthru
        _
    $region40: #{down_forward.1} parent=5 // pred_fallthru
      _
    %p1510 = scmp.le.s32.totalorder 2, %s11
    // Predicated region
    $region45: #{down_forward.1} parent=5 // pred_check
      %p1511 = pneg %p1510
    $region46: #{down_forward.1} parent=5 // pred_check_branch
      %1513 = sbr.rel (%p1511) target = $region48
    $region47: #{down_forward.1} parent=5 // pred_region
      %s1514 = ssub.s32 %s11, 2
      // Predicated region
      $region49: #{down_forward.1} parent=47 // pred_check
        %p1515 = pneg %p150
      $region50: #{down_forward.1} parent=47 // pred_check_branch
        %1517 = sbr.rel (%p1515) target = $region52
      $region51: #{down_forward.1} parent=47 // pred_region
        %p1518 = scmp.lt.s32.totalorder %s17, 1
        %s1519 = scalar_select %p1518, %s17, 1
        %s1520 = smul.addr %s1519, 8
        %s1521 = smul.addr %s1520, 8
        %s1522 = scalar_lea.vmem %s5, %s1521
      $region52: #{down_forward.1} parent=47 // pred_fallthru
        _
    $region48: #{down_forward.1} parent=5 // pred_fallthru
      _
  $region6: #{down_forward.1} parent=0 // loop_footer
    %s15 = sadd.s32 1, %s11
  $region7: #{down_forward.1} parent=0 // loop_footer_branch
    %10 = sbr.rel target = $region3
  $region8: #{down_forward.1} parent=0 // loop_exit
    _

</llo_original>
